<compile_context>
chip_gen: v7x
topology: tpu7x:2x2x1
jax: 0.10.0
libtpu: 0.0.40
codegen_flags: <defaults>
</compile_context>

<pallas_src>
import functools

import jax
import jax.numpy as jnp
from jax import lax
from jax.experimental import pallas as pl
from jax.experimental.pallas import tpu as pltpu


def _pick_row_tile(h_out, halo, target):
    """Largest TH <= target with TH | h_out and (k_eff-1) | TH."""
    if halo == 0:
        for th in range(min(target, h_out), 0, -1):
            if h_out % th == 0:
                return th
        return h_out
    for th in range(min(target, h_out), halo - 1, -1):
        if h_out % th == 0 and th % halo == 0:
            return th
    return h_out  # fallback: single row tile (halo fetched as a second block)


def _dilconv_kernel(xb_ref, xh_ref, dw_ref, pw_ref, shift_ref, o_ref, *,
                    k, dilation, halo, th, w_out, precision):
    """One DilConv row tile: ReLU -> depthwise kxk -> pointwise 1x1 (+BN).

    xb_ref:    (1, TH, W_pad, C_in)          body rows of the padded input
    xh_ref:    (1, halo_block, W_pad, C_in)  halo rows (first `halo` are used)
    dw_ref:    (k*k, C_in)                   depthwise taps, tap = kh*k + kw
    pw_ref:    (C_in, C_out)                 pointwise weights (BN scale folded)
    shift_ref: (1, C_out)                    BN shift (per-channel bias)
    o_ref:     (1, TH, W_out, C_out)
    """
    # Assemble the (TH + halo, W_pad, C_in) window for this row tile.  The
    # concat is along the leading (untiled) dim and doubles as the ReLU pass.
    x = xb_ref[0]
    if halo > 0:
        x = jnp.concatenate([x, xh_ref[0][:halo]], axis=0)
    x = jnp.maximum(x, 0.0).astype(jnp.float32)            # fused ReLU (+ upcast)
    dw = dw_ref[...].astype(jnp.float32)                    # (k*k, C_in)
    c_in = x.shape[-1]

    # Depthwise kxk conv on the VPU.  The W (sublane) shift is hoisted out of
    # the kh loop (k shifted slices per step, not k*k); H shifts are on the
    # leading dim and free.  The first tap initialises the accumulator.
    acc = None
    for kw in range(k):
        x_kw = x[:, kw * dilation:kw * dilation + w_out, :]      # one W shift / kw
        for kh in range(k):
            tap = dw[kh * k + kw:kh * k + kw + 1, :]             # (1, C_in) lane bcast
            term = x_kw[kh * dilation:kh * dilation + th, :, :] * tap
            acc = term if acc is None else acc + term

    # Pointwise 1x1 conv (+ folded BN scale) as one MXU matmul; BN shift is a
    # per-channel bias.  Keep W_out a multiple of 8 so the (TH, W_out) merge
    # stays within the (8,128) tiling (demo: W_out = 16).
    y = jnp.dot(acc.reshape(th * w_out, c_in),
                pw_ref[...].astype(jnp.float32),
                precision=precision,
                preferred_element_type=jnp.float32)
    y = y + shift_ref[...]
    o_ref[0] = y.reshape(th, w_out, -1).astype(o_ref.dtype)


def _dilconv_forward(x_nhwc, params, *, kernel_size, stride, padding, dilation,
                     eps=1e-5, row_tile=16, precision=None, stream_dtype=None):
    """ReLU -> depthwise -> pointwise -> BatchNorm (inference), NHWC layout."""
    n, h, w, c_in = x_nhwc.shape
    k = kernel_size
    c_out = params["pw"].shape[0]
    k_eff = (k - 1) * dilation + 1
    halo = k_eff - 1
    h_pad, w_pad = h + 2 * padding, w + 2 * padding
    h_out = h_pad - k_eff + 1                      # stride-1 sizes (subsampled below)
    w_out = w_pad - k_eff + 1
    assert h_out >= 1 and w_out >= 1
    assert halo == 0 or h_out >= halo, "image too small for this kernel size"

    # Zero-pad in the wrapper: equivalent to PyTorch's conv padding because the
    # in-kernel ReLU maps 0 -> 0.
    x_pad = jnp.pad(x_nhwc,
                    ((0, 0), (padding, padding), (padding, padding), (0, 0)))
    if stream_dtype is not None:
        x_pad = x_pad.astype(stream_dtype)         # halve HBM traffic (v6e/v7x)

    # Depthwise weights (C_in, 1, k, k) -> (k*k, C_in), tap index = kh*k + kw.
    dw = jnp.transpose(params["dw"][:, 0, :, :], (1, 2, 0)).reshape(k * k, c_in)
    # Fold inference BatchNorm into the pointwise weights + per-channel bias.
    scale = params["gamma"] / jnp.sqrt(params["var"] + eps)            # (C_out,)
    shift = (params["beta"] - params["mean"] * scale).reshape(1, c_out)
    pw = params["pw"][:, :, 0, 0].T * scale.reshape(1, c_out)          # (C_in, C_out)

    # ---- row tiling with halo (re-derive row_tile per VMEM budget / chip) ----
    th = _pick_row_tile(h_out, halo, row_tile)
    n_row_tiles = h_out // th
    if halo == 0:
        halo_block = 1                                  # dummy 1-row fetch, unused
        halo_index_map = lambda i, j: (i, 0, 0, 0)
    elif th % halo == 0:
        halo_block = halo
        hstride = th // halo
        halo_index_map = lambda i, j: (i, (j + 1) * hstride, 0, 0)
    else:
        # Fallback (th == h_out, h_out not halo-aligned): fetch the halo rows
        # as the first rows of a second th-sized (partial) block.
        halo_block = th
        halo_index_map = lambda i, j: (i, j + 1, 0, 0)

    kernel = functools.partial(_dilconv_kernel, k=k, dilation=dilation,
                               halo=halo, th=th, w_out=w_out,
                               precision=precision)

    # VMEM budget: double-buffered body/halo/output blocks + a few window-sized
    # f32 temporaries inside the body.  Clamped to stay inside v7x's 64 MiB.
    in_item = x_pad.dtype.itemsize
    out_item = x_nhwc.dtype.itemsize
    win_f32 = (th + halo) * w_pad * c_in * 4
    vmem_bytes = (2 * (th + halo_block) * w_pad * c_in * in_item
                  + 2 * th * w_out * c_out * out_item
                  + 4 * win_f32 + (2 << 20))
    vmem_limit = int(min(max(vmem_bytes, 32 << 20), 64 << 20))

    cost = pl.CostEstimate(
        flops=2 * n * h_out * w_out * c_in * (k * k + c_out),
        transcendentals=0,
        bytes_accessed=int(x_pad.size * in_item
                           + (dw.size + pw.size + shift.size) * 4
                           + n * h_out * w_out * c_out * out_item))

    out = pl.pallas_call(
        kernel,
        out_shape=jax.ShapeDtypeStruct((n, h_out, w_out, c_out), x_nhwc.dtype),
        grid_spec=pltpu.PrefetchScalarGridSpec(
            num_scalar_prefetch=0,
            grid=(n, n_row_tiles),
            in_specs=[
                # Body rows of the padded input for this row tile.
                pl.BlockSpec((1, th, w_pad, c_in), lambda i, j: (i, j, 0, 0)),
                # Halo rows (the first k_eff-1 rows past the body block).
                pl.BlockSpec((1, halo_block, w_pad, c_in), halo_index_map),
                pl.BlockSpec((k * k, c_in), lambda i, j: (0, 0)),
                pl.BlockSpec((c_in, c_out), lambda i, j: (0, 0)),
                pl.BlockSpec((1, c_out), lambda i, j: (0, 0)),
            ],
            out_specs=pl.BlockSpec((1, th, w_out, c_out),
                                   lambda i, j: (i, j, 0, 0)),
        ),
        compiler_params=pltpu.CompilerParams(
            dimension_semantics=("parallel", "parallel"),
            vmem_limit_bytes=vmem_limit,
        ),
        cost_estimate=cost,
    )(x_pad, x_pad,
      dw.astype(jnp.float32), pw.astype(jnp.float32), shift.astype(jnp.float32))

    if stride > 1:
        # TODO(synk): a dedicated strided depthwise kernel would skip the
        # dropped rows/cols; subsampling after the per-pixel pointwise+BN is
        # exact but does stride**2 redundant work.
        out = out[:, ::stride, ::stride, :]
    return out


class SepConvPallas:
    """SepConv: DilConv(C_in->C_in, stride) then DilConv(C_in->C_out, 1)."""

    def __init__(self, C_in, C_out, kernel_size, stride, padding, affine=True,
                 *, key, dtype=jnp.float32):
        self.kernel_size = kernel_size
        self.stride = stride
        self.padding = padding
        keys = jax.random.split(key, 10)

        def conv_uniform(k_, shape):
            fan_in = shape[1] * shape[2] * shape[3]
            bound = 1.0 / (fan_in ** 0.5)
            return jax.random.uniform(k_, shape, dtype, -bound, bound)

        def bn_params(kg, kb, km, c):
            gamma = (1.0 + 0.1 * jax.random.normal(kg, (c,), dtype)) if affine \
                else jnp.ones((c,), dtype)
            beta = (0.1 * jax.random.normal(kb, (c,), dtype)) if affine \
                else jnp.zeros((c,), dtype)
            mean = 0.05 * jax.random.normal(km, (c,), dtype)
            var = jnp.full((c,), 0.9, dtype)
            return gamma, beta, mean, var

        g1, b1, m1, v1 = bn_params(keys[2], keys[3], keys[4], C_in)
        g2, b2, m2, v2 = bn_params(keys[7], keys[8], keys[9], C_out)
        ks = kernel_size
        self.params = {
            "dc1": {"dw": conv_uniform(keys[0], (C_in, 1, ks, ks)),
                    "pw": conv_uniform(keys[1], (C_in, C_in, 1, 1)),
                    "gamma": g1, "beta": b1, "mean": m1, "var": v1},
            "dc2": {"dw": conv_uniform(keys[5], (C_in, 1, ks, ks)),
                    "pw": conv_uniform(keys[6], (C_out, C_in, 1, 1)),
                    "gamma": g2, "beta": b2, "mean": m2, "var": v2},
        }

    def forward_nhwc(self, x_nhwc, *, precision=None, row_tile=16,
                     stream_dtype=None):
        """NHWC fast path: channels on the 128-lane axis, no transposes."""
        y = _dilconv_forward(x_nhwc, self.params["dc1"],
                             kernel_size=self.kernel_size, stride=self.stride,
                             padding=self.padding, dilation=1,
                             row_tile=row_tile, precision=precision,
                             stream_dtype=stream_dtype)
        y = _dilconv_forward(y, self.params["dc2"],
                             kernel_size=self.kernel_size, stride=1,
                             padding=self.padding, dilation=1,
                             row_tile=row_tile, precision=precision,
                             stream_dtype=stream_dtype)
        return y

    def __call__(self, x_nchw, *, precision=None, row_tile=16,
                 stream_dtype=None):
        # NCHW interface to match the PyTorch spec.  Each transpose is an extra
        # HBM pass; NHWC pipelines should call forward_nhwc directly.
        x = jnp.transpose(x_nchw, (0, 2, 3, 1))
        y = self.forward_nhwc(x, precision=precision, row_tile=row_tile,
                              stream_dtype=stream_dtype)
        return jnp.transpose(y, (0, 3, 1, 2))


# ---------------- pure-JAX reference (same math, XLA convs) -----------------
def _dilconv_reference(x_nchw, params, *, stride, padding, dilation, eps=1e-5):
    y = jnp.maximum(x_nchw, 0.0)
    y = lax.conv_general_dilated(
        y, params["dw"], window_strides=(stride, stride),
        padding=((padding, padding), (padding, padding)),
        rhs_dilation=(dilation, dilation),
        dimension_numbers=("NCHW", "OIHW", "NCHW"),
        feature_group_count=x_nchw.shape[1],
        precision=lax.Precision.HIGHEST)
    y = lax.conv_general_dilated(
        y, params["pw"], window_strides=(1, 1), padding="VALID",
        dimension_numbers=("NCHW", "OIHW", "NCHW"),
        precision=lax.Precision.HIGHEST)
    scale = params["gamma"] / jnp.sqrt(params["var"] + eps)
    shift = params["beta"] - params["mean"] * scale
    return y * scale[None, :, None, None] + shift[None, :, None, None]


def sepconv_reference(x_nchw, module):
    y = _dilconv_reference(x_nchw, module.params["dc1"], stride=module.stride,
                           padding=module.padding, dilation=1)
    y = _dilconv_reference(y, module.params["dc2"], stride=1,
                           padding=module.padding, dilation=1)
    return y


if __name__ == "__main__":
    root = jax.random.PRNGKey(0)
    k_params, k_x = jax.random.split(root)

    N, C_in, C_out, H, W = 2, 4, 8, 16, 16
    kernel_size, stride, padding = 3, 1, 1

    module = SepConvPallas(C_in, C_out, kernel_size, stride, padding,
                           affine=True, key=k_params)
    x = jax.random.normal(k_x, (N, C_in, H, W), dtype=jnp.float32)
    y_ref = jax.block_until_ready(sepconv_reference(x, module))

    # 1) Strict run: f32 streaming, HIGHEST-precision matmul, row_tile=8 so the
    #    halo tiling is exercised across two row tiles per image.
    y_strict = jax.block_until_ready(
        module(x, precision=lax.Precision.HIGHEST, row_tile=8))
    assert y_strict.shape == (N, C_out, H, W), y_strict.shape
    err = float(jnp.max(jnp.abs(y_strict - y_ref)))
    assert jnp.allclose(y_strict, y_ref, atol=1e-4, rtol=1e-4), f"mismatch: {err}"

    # 2) Fast configuration: bf16 activation streaming + default (single-pass
    #    bf16 MXU) matmul precision; looser tolerance reflects bf16 rounding.
    y_fast = jax.block_until_ready(module(x, stream_dtype=jnp.bfloat16))
    err = float(jnp.max(jnp.abs(y_fast - y_ref)))
    assert jnp.allclose(y_fast, y_ref, atol=5e-2, rtol=5e-2), f"mismatch: {err}"

    print("KERNEL_OK")
</pallas_src>

<mosaic_0001>
module attributes {stable_mosaic.version = 11 : i64} {
  func.func @_dilconv_kernel(%arg0: i32, %arg1: i32, %arg2: memref<1x8x18x4xf32, #tpu.memory_space<vmem>>, %arg3: memref<1x2x18x4xf32, #tpu.memory_space<vmem>>, %arg4: memref<9x4xf32, #tpu.memory_space<vmem>>, %arg5: memref<4x4xf32, #tpu.memory_space<vmem>>, %arg6: memref<1x4xf32, #tpu.memory_space<vmem>>, %arg7: memref<1x8x16x4xf32, #tpu.memory_space<vmem>>) attributes {dimension_semantics = [#tpu.dimension_semantics<parallel>, #tpu.dimension_semantics<parallel>], iteration_bounds = array<i64: 2, 2>, scalar_prefetch = 0 : i64, scratch_operands = 0 : i64, tpu.core_type = #tpu.core_type<tc>, window_params = [{transform_indices = @transform_0, window_bounds = array<i64: 1, 8, 18, 4>}, {transform_indices = @transform_1, window_bounds = array<i64: 1, 2, 18, 4>}, {pipeline_mode = #tpu.pipeline_mode<synchronous>, transform_indices = @transform_2, window_bounds = array<i64: 9, 4>}, {pipeline_mode = #tpu.pipeline_mode<synchronous>, transform_indices = @transform_3, window_bounds = array<i64: 4, 4>}, {pipeline_mode = #tpu.pipeline_mode<synchronous>, transform_indices = @transform_4, window_bounds = array<i64: 1, 4>}, {transform_indices = @transform_5, window_bounds = array<i64: 1, 8, 16, 4>}]} {
    %c0 = arith.constant 0 : index
    %c0_0 = arith.constant 0 : index
    %c0_1 = arith.constant 0 : index
    %c0_2 = arith.constant 0 : index
    %0 = vector.load %arg2[%c0, %c0_0, %c0_1, %c0_2] : memref<1x8x18x4xf32, #tpu.memory_space<vmem>>, vector<1x8x18x4xf32>
    %1 = vector.shape_cast %0 : vector<1x8x18x4xf32> to vector<8x18x4xf32>
    %c0_3 = arith.constant 0 : index
    %c0_4 = arith.constant 0 : index
    %c0_5 = arith.constant 0 : index
    %c0_6 = arith.constant 0 : index
    %2 = vector.load %arg3[%c0_3, %c0_4, %c0_5, %c0_6] : memref<1x2x18x4xf32, #tpu.memory_space<vmem>>, vector<1x2x18x4xf32>
    %3 = vector.shape_cast %2 : vector<1x2x18x4xf32> to vector<2x18x4xf32>
    %4 = tpu.concatenate %1, %3 in 0 : vector<8x18x4xf32>, vector<2x18x4xf32> -> vector<10x18x4xf32>
    %cst = arith.constant 0.000000e+00 : f32
    %5 = vector.broadcast %cst : f32 to vector<10x18x4xf32>
    %6 = arith.maximumf %4, %5 : vector<10x18x4xf32>
    %c0_7 = arith.constant 0 : index
    %c0_8 = arith.constant 0 : index
    %7 = vector.load %arg4[%c0_7, %c0_8] : memref<9x4xf32, #tpu.memory_space<vmem>>, vector<9x4xf32>
    %8 = vector.extract_strided_slice %6 {offsets = [0, 0, 0], sizes = [10, 16, 4], strides = [1, 1, 1]} : vector<10x18x4xf32> to vector<10x16x4xf32>
    %9 = vector.extract_strided_slice %7 {offsets = [0, 0], sizes = [1, 4], strides = [1, 1]} : vector<9x4xf32> to vector<1x4xf32>
    %10 = vector.extract_strided_slice %8 {offsets = [0, 0, 0], sizes = [8, 16, 4], strides = [1, 1, 1]} : vector<10x16x4xf32> to vector<8x16x4xf32>
    %11 = vector.shape_cast %9 : vector<1x4xf32> to vector<1x1x4xf32>
    %12 = vector.broadcast %11 : vector<1x1x4xf32> to vector<8x16x4xf32>
    %13 = arith.mulf %10, %12 : vector<8x16x4xf32>
    %14 = vector.extract_strided_slice %7 {offsets = [3, 0], sizes = [1, 4], strides = [1, 1]} : vector<9x4xf32> to vector<1x4xf32>
    %15 = vector.extract_strided_slice %8 {offsets = [1, 0, 0], sizes = [8, 16, 4], strides = [1, 1, 1]} : vector<10x16x4xf32> to vector<8x16x4xf32>
    %16 = vector.shape_cast %14 : vector<1x4xf32> to vector<1x1x4xf32>
    %17 = vector.broadcast %16 : vector<1x1x4xf32> to vector<8x16x4xf32>
    %18 = arith.mulf %15, %17 : vector<8x16x4xf32>
    %19 = arith.addf %13, %18 : vector<8x16x4xf32>
    %20 = vector.extract_strided_slice %7 {offsets = [6, 0], sizes = [1, 4], strides = [1, 1]} : vector<9x4xf32> to vector<1x4xf32>
    %21 = vector.extract_strided_slice %8 {offsets = [2, 0, 0], sizes = [8, 16, 4], strides = [1, 1, 1]} : vector<10x16x4xf32> to vector<8x16x4xf32>
    %22 = vector.shape_cast %20 : vector<1x4xf32> to vector<1x1x4xf32>
    %23 = vector.broadcast %22 : vector<1x1x4xf32> to vector<8x16x4xf32>
    %24 = arith.mulf %21, %23 : vector<8x16x4xf32>
    %25 = arith.addf %19, %24 : vector<8x16x4xf32>
    %26 = vector.extract_strided_slice %6 {offsets = [0, 1, 0], sizes = [10, 16, 4], strides = [1, 1, 1]} : vector<10x18x4xf32> to vector<10x16x4xf32>
    %27 = vector.extract_strided_slice %7 {offsets = [1, 0], sizes = [1, 4], strides = [1, 1]} : vector<9x4xf32> to vector<1x4xf32>
    %28 = vector.extract_strided_slice %26 {offsets = [0, 0, 0], sizes = [8, 16, 4], strides = [1, 1, 1]} : vector<10x16x4xf32> to vector<8x16x4xf32>
    %29 = vector.shape_cast %27 : vector<1x4xf32> to vector<1x1x4xf32>
    %30 = vector.broadcast %29 : vector<1x1x4xf32> to vector<8x16x4xf32>
    %31 = arith.mulf %28, %30 : vector<8x16x4xf32>
    %32 = arith.addf %25, %31 : vector<8x16x4xf32>
    %33 = vector.extract_strided_slice %7 {offsets = [4, 0], sizes = [1, 4], strides = [1, 1]} : vector<9x4xf32> to vector<1x4xf32>
    %34 = vector.extract_strided_slice %26 {offsets = [1, 0, 0], sizes = [8, 16, 4], strides = [1, 1, 1]} : vector<10x16x4xf32> to vector<8x16x4xf32>
    %35 = vector.shape_cast %33 : vector<1x4xf32> to vector<1x1x4xf32>
    %36 = vector.broadcast %35 : vector<1x1x4xf32> to vector<8x16x4xf32>
    %37 = arith.mulf %34, %36 : vector<8x16x4xf32>
    %38 = arith.addf %32, %37 : vector<8x16x4xf32>
    %39 = vector.extract_strided_slice %7 {offsets = [7, 0], sizes = [1, 4], strides = [1, 1]} : vector<9x4xf32> to vector<1x4xf32>
    %40 = vector.extract_strided_slice %26 {offsets = [2, 0, 0], sizes = [8, 16, 4], strides = [1, 1, 1]} : vector<10x16x4xf32> to vector<8x16x4xf32>
    %41 = vector.shape_cast %39 : vector<1x4xf32> to vector<1x1x4xf32>
    %42 = vector.broadcast %41 : vector<1x1x4xf32> to vector<8x16x4xf32>
    %43 = arith.mulf %40, %42 : vector<8x16x4xf32>
    %44 = arith.addf %38, %43 : vector<8x16x4xf32>
    %45 = vector.extract_strided_slice %6 {offsets = [0, 2, 0], sizes = [10, 16, 4], strides = [1, 1, 1]} : vector<10x18x4xf32> to vector<10x16x4xf32>
    %46 = vector.extract_strided_slice %7 {offsets = [2, 0], sizes = [1, 4], strides = [1, 1]} : vector<9x4xf32> to vector<1x4xf32>
    %47 = vector.extract_strided_slice %45 {offsets = [0, 0, 0], sizes = [8, 16, 4], strides = [1, 1, 1]} : vector<10x16x4xf32> to vector<8x16x4xf32>
    %48 = vector.shape_cast %46 : vector<1x4xf32> to vector<1x1x4xf32>
    %49 = vector.broadcast %48 : vector<1x1x4xf32> to vector<8x16x4xf32>
    %50 = arith.mulf %47, %49 : vector<8x16x4xf32>
    %51 = arith.addf %44, %50 : vector<8x16x4xf32>
    %52 = vector.extract_strided_slice %7 {offsets = [5, 0], sizes = [1, 4], strides = [1, 1]} : vector<9x4xf32> to vector<1x4xf32>
    %53 = vector.extract_strided_slice %45 {offsets = [1, 0, 0], sizes = [8, 16, 4], strides = [1, 1, 1]} : vector<10x16x4xf32> to vector<8x16x4xf32>
    %54 = vector.shape_cast %52 : vector<1x4xf32> to vector<1x1x4xf32>
    %55 = vector.broadcast %54 : vector<1x1x4xf32> to vector<8x16x4xf32>
    %56 = arith.mulf %53, %55 : vector<8x16x4xf32>
    %57 = arith.addf %51, %56 : vector<8x16x4xf32>
    %58 = vector.extract_strided_slice %7 {offsets = [8, 0], sizes = [1, 4], strides = [1, 1]} : vector<9x4xf32> to vector<1x4xf32>
    %59 = vector.extract_strided_slice %45 {offsets = [2, 0, 0], sizes = [8, 16, 4], strides = [1, 1, 1]} : vector<10x16x4xf32> to vector<8x16x4xf32>
    %60 = vector.shape_cast %58 : vector<1x4xf32> to vector<1x1x4xf32>
    %61 = vector.broadcast %60 : vector<1x1x4xf32> to vector<8x16x4xf32>
    %62 = arith.mulf %59, %61 : vector<8x16x4xf32>
    %63 = arith.addf %57, %62 : vector<8x16x4xf32>
    %64 = vector.shape_cast %63 : vector<8x16x4xf32> to vector<128x4xf32>
    %c0_9 = arith.constant 0 : index
    %c0_10 = arith.constant 0 : index
    %65 = vector.load %arg5[%c0_9, %c0_10] : memref<4x4xf32, #tpu.memory_space<vmem>>, vector<4x4xf32>
    %cst_11 = arith.constant dense<0.000000e+00> : vector<128x4xf32>
    %66 = tpu.matmul %64, %65, %cst_11 {dimension_numbers = #tpu.dot_dimension_numbers<[1], [0], [0], [1], [0, 0, 1, 1], [], []>, precision = #tpu.contract_precision<fp32>} : vector<128x4xf32>, vector<4x4xf32>, vector<128x4xf32> -> vector<128x4xf32>
    %c0_12 = arith.constant 0 : index
    %c0_13 = arith.constant 0 : index
    %67 = vector.load %arg6[%c0_12, %c0_13] : memref<1x4xf32, #tpu.memory_space<vmem>>, vector<1x4xf32>
    %68 = vector.broadcast %67 : vector<1x4xf32> to vector<128x4xf32>
    %69 = arith.addf %66, %68 : vector<128x4xf32>
    %70 = vector.shape_cast %69 : vector<128x4xf32> to vector<8x16x4xf32>
    %c0_14 = arith.constant 0 : index
    %c0_15 = arith.constant 0 : index
    %c0_16 = arith.constant 0 : index
    %c0_17 = arith.constant 0 : index
    %71 = vector.load %arg7[%c0_14, %c0_15, %c0_16, %c0_17] : memref<1x8x16x4xf32, #tpu.memory_space<vmem>>, vector<1x8x16x4xf32>
    %72 = vector.shape_cast %71 : vector<1x8x16x4xf32> to vector<8x16x4xf32>
    %73 = vector.shape_cast %70 : vector<8x16x4xf32> to vector<1x8x16x4xf32>
    tpu.vector_store %arg7[%c0_14, %c0_15, %c0_16, %c0_17], %73 {strides = array<i32>} : memref<1x8x16x4xf32, #tpu.memory_space<vmem>>, vector<1x8x16x4xf32>,
    return
  }
  func.func @transform_0(%arg0: i32, %arg1: i32) -> (i32, i32, i32, i32) {
    %c0_i32 = arith.constant 0 : i32
    %c0_i32_0 = arith.constant 0 : i32
    %c0_i32_1 = arith.constant 0 : i32
    return %arg0, %arg1, %c0_i32, %c0_i32_0 : i32, i32, i32, i32
  }
  func.func @transform_1(%arg0: i32, %arg1: i32) -> (i32, i32, i32, i32) {
    %c1_i32 = arith.constant 1 : i32
    %0 = arith.addi %arg1, %c1_i32 : i32
    %c4_i32 = arith.constant 4 : i32
    %1 = arith.muli %0, %c4_i32 : i32
    %c0_i32 = arith.constant 0 : i32
    %c0_i32_0 = arith.constant 0 : i32
    %c0_i32_1 = arith.constant 0 : i32
    return %arg0, %1, %c0_i32, %c0_i32_0 : i32, i32, i32, i32
  }
  func.func @transform_2(%arg0: i32, %arg1: i32) -> (i32, i32) {
    %c0_i32 = arith.constant 0 : i32
    %c0_i32_0 = arith.constant 0 : i32
    %c0_i32_1 = arith.constant 0 : i32
    return %c0_i32, %c0_i32_0 : i32, i32
  }
  func.func @transform_3(%arg0: i32, %arg1: i32) -> (i32, i32) {
    %c0_i32 = arith.constant 0 : i32
    %c0_i32_0 = arith.constant 0 : i32
    %c0_i32_1 = arith.constant 0 : i32
    return %c0_i32, %c0_i32_0 : i32, i32
  }
  func.func @transform_4(%arg0: i32, %arg1: i32) -> (i32, i32) {
    %c0_i32 = arith.constant 0 : i32
    %c0_i32_0 = arith.constant 0 : i32
    %c0_i32_1 = arith.constant 0 : i32
    return %c0_i32, %c0_i32_0 : i32, i32
  }
  func.func @transform_5(%arg0: i32, %arg1: i32) -> (i32, i32, i32, i32) {
    %c0_i32 = arith.constant 0 : i32
    %c0_i32_0 = arith.constant 0 : i32
    %c0_i32_1 = arith.constant 0 : i32
    return %arg0, %arg1, %c0_i32, %c0_i32_0 : i32, i32, i32, i32
  }
}

</mosaic_0001>

<llo_original>
// kernel: tpu_custom_call.1
$region0: #{tpu_custom_call.1}
  #allocation0 [shape = 'u32[]', space=smem, size = 0x4, offset = 0x4, fixed_abs, tag = 'smem constant byte address 0x4 - core index']
  #allocation1 [shape = 'u32[144,128]{1,0:T(1,128)}', space=vmem, size = 0x12000, scoped, tag = 'internal scratch']
  %s0 = inlined_call_operand.vmem [shape: f32[2,18,18,4], index: 0, kind: input, shape index: {}]
  %s1 = inlined_call_operand.vmem [shape: f32[2,18,18,4], index: 1, kind: input, shape index: {}]
  %s2 = inlined_call_operand.vmem [shape: f32[9,4], index: 2, kind: input, shape index: {}]
  %s3 = inlined_call_operand.vmem [shape: f32[4,4], index: 3, kind: input, shape index: {}]
  %s4 = inlined_call_operand.vmem [shape: f32[1,4], index: 4, kind: input, shape index: {}]
  %s5 = inlined_call_operand.vmem [shape: f32[2,16,16,4], index: 5, kind: output, shape index: {}]
  %s6 = sld [smem:[#allocation0]]
  $region53: #{tpu_custom_call.1} parent=0
    _
  %s8 = ssub.s32 1, %s6
  %s9 = scalar_select 0, %s8, %s6
  loop: start=0, step=1, limit=6
  $region2: #{tpu_custom_call.1} parent=0 // loop_pre_header
    _
  $region3: #{tpu_custom_call.1} parent=0 // loop_header
    %s11 = sphi 0, %s15
    %p12 = scmp.ge.s32.totalorder %s11, 6
    %s18 = sphi 0, %s30
    %s19 = sphi 0, %s26
    %s20 = sphi 0, %s18
    %s21 = sphi 0, %s19
    %s22 = sphi 0, %s20
    %s23 = sphi 0, %s21
    %s35 = sphi 0, %s37
    %s38 = sphi 0, %s35
    %s39 = sphi 0, %s38
    %s55 = sphi 0, %s39
    %s67 = sphi 0, %s69
    %s70 = sphi 0, %s67
    %s71 = sphi 0, %s70
    %s87 = sphi 0, %s71
    %s91 = sphi 0, %s91
    %s93 = sphi 0, %s91
    %s94 = sphi 0, %s93
    %s108 = sphi 0, %s94
    %s112 = sphi 0, %s112
    %s114 = sphi 0, %s112
    %s115 = sphi 0, %s114
    %s129 = sphi 0, %s115
    %s133 = sphi 0, %s133
    %s135 = sphi 0, %s133
    %s136 = sphi 0, %s135
    %s150 = sphi 0, %s136
    %s158 = sphi 0, %s160
    %s161 = sphi 0, %s158
    %s162 = sphi 0, %s161
    %s178 = sphi 0, %s162
  $region4: #{tpu_custom_call.1} parent=0 // loop_header_branch
    %14 = sbr.rel (%p12) target = $region8
  $region5: #{tpu_custom_call.1} parent=0 // loop_body
    %s16 = ssub.s32 %s11, 1
    %s17 = ssub.s32 %s11, 2
    %s24 = sadd.s32 1, %s19
    %p25 = scmp.ge.s32.totalorder %s24, 2
    %s26 = scalar_select %p25, 0, %s24
    %s27 = sadd.s32 1, %s18
    %s28 = scalar_select %p25, %s27, %s18
    %p29 = scmp.ge.s32.totalorder %s28, 2
    %s30 = scalar_select %p29, 0, %s28
    %s31 = ssub.s32 %s18, %s30
    %s32 = ssub.s32 %s19, %s26
    %s33 = sor.u32 %s31, %s32
    %p34 = scmp.eq.s32.totalorder %s33, 0
    %s36 = sadd.s32 %s35, 1
    %s37 = scalar_select %p34, %s35, %s36
    %p40 = pneg %p34
    %p41 = scmp.eq.s32.totalorder %s11, 3
    %p42 = por %p40, %p41
    %p43 = scmp.ne.s32.totalorder %s35, %s38
    %p44 = scmp.eq.s32.totalorder %s11, 0
    %p45 = por %p43, %p44
    %p46 = scmp.ne.s32.totalorder %s35, %s38
    %p47 = scmp.eq.s32.totalorder %s16, 3
    %p48 = por %p46, %p47
    %p49 = scmp.ne.s32.totalorder %s38, %s39
    %p50 = scmp.eq.s32.totalorder %s16, 0
    %p51 = por %p49, %p50
    %p52 = scmp.ne.s32.totalorder %s38, %s39
    %p53 = scmp.eq.s32.totalorder %s17, 3
    %p54 = por %p52, %p53
    %p56 = scmp.ne.s32.totalorder %s39, %s55
    %p57 = scmp.eq.s32.totalorder %s17, 0
    %p58 = por %p56, %p57
    %s59 = sadd.s32 %s19, 1
    %s60 = smul.u32 %s59, 4
    %s61 = sadd.s32 %s26, 1
    %s62 = smul.u32 %s61, 4
    %s63 = ssub.s32 %s18, %s30
    %s64 = ssub.s32 %s60, %s62
    %s65 = sor.u32 %s63, %s64
    %p66 = scmp.eq.s32.totalorder %s65, 0
    %s68 = sadd.s32 %s67, 1
    %s69 = scalar_select %p66, %s67, %s68
    %p72 = pneg %p66
    %p73 = scmp.eq.s32.totalorder %s11, 3
    %p74 = por %p72, %p73
    %p75 = scmp.ne.s32.totalorder %s67, %s70
    %p76 = scmp.eq.s32.totalorder %s11, 0
    %p77 = por %p75, %p76
    %p78 = scmp.ne.s32.totalorder %s67, %s70
    %p79 = scmp.eq.s32.totalorder %s16, 3
    %p80 = por %p78, %p79
    %p81 = scmp.ne.s32.totalorder %s70, %s71
    %p82 = scmp.eq.s32.totalorder %s16, 0
    %p83 = por %p81, %p82
    %p84 = scmp.ne.s32.totalorder %s70, %s71
    %p85 = scmp.eq.s32.totalorder %s17, 3
    %p86 = por %p84, %p85
    %p88 = scmp.ne.s32.totalorder %s71, %s87
    %p89 = scmp.eq.s32.totalorder %s17, 0
    %p90 = por %p88, %p89
    %s92 = sadd.s32 %s91, 1
    %p95 = scmp.eq.s32.totalorder %s11, 3
    %p96 = scmp.ne.s32.totalorder %s91, %s93
    %p97 = scmp.eq.s32.totalorder %s11, 0
    %p98 = por %p96, %p97
    %p99 = scmp.ne.s32.totalorder %s91, %s93
    %p100 = scmp.eq.s32.totalorder %s16, 3
    %p101 = por %p99, %p100
    %p102 = scmp.ne.s32.totalorder %s93, %s94
    %p103 = scmp.eq.s32.totalorder %s16, 0
    %p104 = por %p102, %p103
    %p105 = scmp.ne.s32.totalorder %s93, %s94
    %p106 = scmp.eq.s32.totalorder %s17, 3
    %p107 = por %p105, %p106
    %p109 = scmp.ne.s32.totalorder %s94, %s108
    %p110 = scmp.eq.s32.totalorder %s17, 0
    %p111 = por %p109, %p110
    %s113 = sadd.s32 %s112, 1
    %p116 = scmp.eq.s32.totalorder %s11, 3
    %p117 = scmp.ne.s32.totalorder %s112, %s114
    %p118 = scmp.eq.s32.totalorder %s11, 0
    %p119 = por %p117, %p118
    %p120 = scmp.ne.s32.totalorder %s112, %s114
    %p121 = scmp.eq.s32.totalorder %s16, 3
    %p122 = por %p120, %p121
    %p123 = scmp.ne.s32.totalorder %s114, %s115
    %p124 = scmp.eq.s32.totalorder %s16, 0
    %p125 = por %p123, %p124
    %p126 = scmp.ne.s32.totalorder %s114, %s115
    %p127 = scmp.eq.s32.totalorder %s17, 3
    %p128 = por %p126, %p127
    %p130 = scmp.ne.s32.totalorder %s115, %s129
    %p131 = scmp.eq.s32.totalorder %s17, 0
    %p132 = por %p130, %p131
    %s134 = sadd.s32 %s133, 1
    %p137 = scmp.eq.s32.totalorder %s11, 3
    %p138 = scmp.ne.s32.totalorder %s133, %s135
    %p139 = scmp.eq.s32.totalorder %s11, 0
    %p140 = por %p138, %p139
    %p141 = scmp.ne.s32.totalorder %s133, %s135
    %p142 = scmp.eq.s32.totalorder %s16, 3
    %p143 = por %p141, %p142
    %p144 = scmp.ne.s32.totalorder %s135, %s136
    %p145 = scmp.eq.s32.totalorder %s16, 0
    %p146 = por %p144, %p145
    %p147 = scmp.ne.s32.totalorder %s135, %s136
    %p148 = scmp.eq.s32.totalorder %s17, 3
    %p149 = por %p147, %p148
    %p151 = scmp.ne.s32.totalorder %s136, %s150
    %p152 = scmp.eq.s32.totalorder %s17, 0
    %p153 = por %p151, %p152
    %s154 = ssub.s32 %s18, %s30
    %s155 = ssub.s32 %s19, %s26
    %s156 = sor.u32 %s154, %s155
    %p157 = scmp.eq.s32.totalorder %s156, 0
    %s159 = sadd.s32 %s158, 1
    %s160 = scalar_select %p157, %s158, %s159
    %p163 = pneg %p157
    %p164 = scmp.eq.s32.totalorder %s11, 3
    %p165 = por %p163, %p164
    %p166 = scmp.ne.s32.totalorder %s158, %s161
    %p167 = scmp.eq.s32.totalorder %s11, 0
    %p168 = por %p166, %p167
    %p169 = scmp.ne.s32.totalorder %s158, %s161
    %p170 = scmp.eq.s32.totalorder %s16, 3
    %p171 = por %p169, %p170
    %p172 = scmp.ne.s32.totalorder %s161, %s162
    %p173 = scmp.eq.s32.totalorder %s16, 0
    %p174 = por %p172, %p173
    %p175 = scmp.ne.s32.totalorder %s161, %s162
    %p176 = scmp.eq.s32.totalorder %s17, 3
    %p177 = por %p175, %p176
    %p179 = scmp.ne.s32.totalorder %s162, %s178
    %p180 = scmp.eq.s32.totalorder %s17, 0
    %p181 = por %p179, %p180
    %p182 = scmp.le.s32.totalorder 1, %s11
    %p183 = scmp.lt.s32.totalorder %s11, 5
    %p184 = pnand %p182, %p183
    %p185 = pneg %p184
    // Predicated region
    $region9: #{tpu_custom_call.1} parent=5 // pred_check
      _
    $region10: #{tpu_custom_call.1} parent=5 // pred_check_branch
      %187 = sbr.rel (%p184) target = $region12
    $region11: #{tpu_custom_call.1} parent=5 // pred_region
      %s188 = ssub.s32 %s11, 1
      // Predicated region
      $region13: #{tpu_custom_call.1} parent=11 // pred_check
        %p189 = pneg %p104
      $region14: #{tpu_custom_call.1} parent=11 // pred_check_branch
        %191 = sbr.rel (%p189) target = $region16
      $region15: #{tpu_custom_call.1} parent=11 // pred_region
        _
      $region16: #{tpu_custom_call.1} parent=11 // pred_fallthru
        _
      // Predicated region
      $region17: #{tpu_custom_call.1} parent=11 // pred_check
        %p192 = pneg %p125
      $region18: #{tpu_custom_call.1} parent=11 // pred_check_branch
        %194 = sbr.rel (%p192) target = $region20
      $region19: #{tpu_custom_call.1} parent=11 // pred_region
        _
      $region20: #{tpu_custom_call.1} parent=11 // pred_fallthru
        _
      // Predicated region
      $region21: #{tpu_custom_call.1} parent=11 // pred_check
        %p195 = pneg %p146
      $region22: #{tpu_custom_call.1} parent=11 // pred_check_branch
        %197 = sbr.rel (%p195) target = $region24
      $region23: #{tpu_custom_call.1} parent=11 // pred_region
        _
      $region24: #{tpu_custom_call.1} parent=11 // pred_fallthru
        _
    $region12: #{tpu_custom_call.1} parent=5 // pred_fallthru
      _
    %p198 = scmp.lt.s32.totalorder %s11, 4
    // Predicated region
    $region25: #{tpu_custom_call.1} parent=5 // pred_check
      %p199 = pneg %p198
    $region26: #{tpu_custom_call.1} parent=5 // pred_check_branch
      %201 = sbr.rel (%p199) target = $region28
    $region27: #{tpu_custom_call.1} parent=5 // pred_region
      // Predicated region
      $region29: #{tpu_custom_call.1} parent=27 // pred_check
        %p202 = pneg %p45
      $region30: #{tpu_custom_call.1} parent=27 // pred_check_branch
        %204 = sbr.rel (%p202) target = $region32
      $region31: #{tpu_custom_call.1} parent=27 // pred_region
        %s205 = smul.u32 8, %s19
        %s206 = ssub.s32 18, %s205
        %p207 = scmp.lt.s32.totalorder %s206, 8
        %s208 = scalar_select %p207, %s206, 8
        %s209 = smul.u32 128, %s208
        %s210 = smul.u32 %s209, 3
        %p211 = scmp.lt.s32.totalorder %s18, 1
        %s212 = scalar_select %p211, %s18, 1
        %p213 = scmp.lt.s32.totalorder %s205, 17
        %s214 = scalar_select %p213, %s205, 17
        %s215 = smul.addr %s214, 3
        %s216 = smul.addr %s212, 54
        %s217 = sadd.s32 %s215, %s216
        %s218 = smul.addr %s217, 8
        %s219 = scalar_lea.vmem %s0, %s218
        %s220 = smul.u32 8, %s19
        %s221 = ssub.s32 18, %s220
        %p222 = scmp.lt.s32.totalorder %s221, 8
        %s223 = scalar_select %p222, %s221, 8
        %s224 = smul.u32 128, %s223
        %s225 = smul.u32 %s224, 3
      $region32: #{tpu_custom_call.1} parent=27 // pred_fallthru
        _
      // Predicated region
      $region33: #{tpu_custom_call.1} parent=27 // pred_check
        %p226 = pneg %p77
      $region34: #{tpu_custom_call.1} parent=27 // pred_check_branch
        %228 = sbr.rel (%p226) target = $region36
      $region35: #{tpu_custom_call.1} parent=27 // pred_region
        %s229 = sadd.s32 %s19, 1
        %s230 = smul.u32 %s229, 4
        %s231 = smul.u32 2, %s230
        %p232 = scmp.lt.s32.totalorder %s18, 1
        %s233 = scalar_select %p232, %s18, 1
        %p234 = scmp.lt.s32.totalorder %s231, 17
        %s235 = scalar_select %p234, %s231, 17
        %s236 = smul.addr %s235, 3
        %s237 = smul.addr %s233, 54
        %s238 = sadd.s32 %s236, %s237
        %s239 = smul.addr %s238, 8
        %s240 = scalar_lea.vmem %s1, %s239
        %s241 = sadd.s32 %s19, 1
        %s242 = smul.u32 %s241, 4
        %s243 = smul.u32 2, %s242
      $region36: #{tpu_custom_call.1} parent=27 // pred_fallthru
        _
    $region28: #{tpu_custom_call.1} parent=5 // pred_fallthru
      _
    %p244 = scmp.le.s32.totalorder 1, %s11
    %p245 = scmp.lt.s32.totalorder %s11, 5
    %p246 = pnand %p244, %p245
    %p247 = pneg %p246
    // Predicated region
    $region37: #{tpu_custom_call.1} parent=5 // pred_check
      _
    $region38: #{tpu_custom_call.1} parent=5 // pred_check_branch
      %249 = sbr.rel (%p246) target = $region40
    $region39: #{tpu_custom_call.1} parent=5 // pred_region
      %s250 = ssub.s32 %s11, 1
      %s251 = smul.u32 8, %s21
      %s252 = ssub.s32 18, %s251
      %p253 = scmp.lt.s32.totalorder %s252, 8
      %s254 = scalar_select %p253, %s252, 8
      %s255 = smul.u32 128, %s254
      %s256 = smul.u32 %s255, 3
      %p257 = scmp.lt.s32.totalorder %s20, 1
      %s258 = scalar_select %p257, %s20, 1
      %p259 = scmp.lt.s32.totalorder %s251, 17
      %s260 = scalar_select %p259, %s251, 17
      %s261 = smul.addr %s260, 3
      %s262 = smul.addr %s258, 54
      %s263 = sadd.s32 %s261, %s262
      %s264 = smul.addr %s263, 8
      %s265 = scalar_lea.vmem %s0, %s264
      %p266 = pneg %p51
      %p267 = pneg %p48
      %s268 = sadd.s32 %s21, 1
      %s269 = smul.u32 %s268, 4
      %s270 = smul.u32 2, %s269
      %p271 = scmp.lt.s32.totalorder %s20, 1
      %s272 = scalar_select %p271, %s20, 1
      %p273 = scmp.lt.s32.totalorder %s270, 17
      %s274 = scalar_select %p273, %s270, 17
      %s275 = smul.addr %s274, 3
      %s276 = smul.addr %s272, 54
      %s277 = sadd.s32 %s275, %s276
      %s278 = smul.addr %s277, 8
      %s279 = scalar_lea.vmem %s1, %s278
      %p280 = pneg %p83
      %p281 = pneg %p80
      %p282 = pneg %p104
      %p283 = pneg %p101
      %p284 = pneg %p125
      %p285 = pneg %p122
      %p286 = pneg %p146
      %p287 = pneg %p143
      %p288 = pneg %p174
      %p289 = pneg %p171
      %s290 = smul.u32 8, %s21
      %p291 = scmp.lt.s32.totalorder %s20, 1
      %s292 = scalar_select %p291, %s20, 1
      %p293 = scmp.lt.s32.totalorder %s290, 15
      %s294 = scalar_select %p293, %s290, 15
      %s295 = smul.addr %s294, 2
      %s296 = smul.addr %s292, 32
      %s297 = sadd.s32 %s295, %s296
      %s298 = smul.addr %s297, 8
      %s299 = scalar_lea.vmem %s5, %s298
      %s300 = smul.u32 8, %s21
      %s301 = ssub.s32 18, %s300
      %p302 = scmp.lt.s32.totalorder %s301, 8
      %s303 = scalar_select %p302, %s301, 8
      %s304 = smul.u32 128, %s303
      %s305 = smul.u32 %s304, 3
      %p306 = scmp.lt.s32.totalorder %s20, 1
      %s307 = scalar_select %p306, %s20, 1
      %p308 = scmp.lt.s32.totalorder %s300, 17
      %s309 = scalar_select %p308, %s300, 17
      %s310 = smul.addr %s309, 3
      %s311 = smul.addr %s307, 54
      %s312 = sadd.s32 %s310, %s311
      %s313 = smul.addr %s312, 8
      %s314 = scalar_lea.vmem %s0, %s313
      %s315 = smul.u32 8, %s21
      %s316 = ssub.s32 18, %s315
      %p317 = scmp.lt.s32.totalorder %s316, 8
      %s318 = scalar_select %p317, %s316, 8
      %s319 = smul.u32 128, %s318
      %s320 = smul.u32 %s319, 3
      %s321 = sadd.s32 %s21, 1
      %s322 = smul.u32 %s321, 4
      %s323 = smul.u32 2, %s322
      %p324 = scmp.lt.s32.totalorder %s20, 1
      %s325 = scalar_select %p324, %s20, 1
      %p326 = scmp.lt.s32.totalorder %s323, 17
      %s327 = scalar_select %p326, %s323, 17
      %s328 = smul.addr %s327, 3
      %s329 = smul.addr %s325, 54
      %s330 = sadd.s32 %s328, %s329
      %s331 = smul.addr %s330, 8
      %s332 = scalar_lea.vmem %s1, %s331
      %s333 = sadd.s32 %s21, 1
      %s334 = smul.u32 %s333, 4
      %s335 = smul.u32 2, %s334
      %s336 = smul.u32 8, %s21
      %p337 = scmp.lt.s32.totalorder %s20, 1
      %s338 = scalar_select %p337, %s20, 1
      %p339 = scmp.lt.s32.totalorder %s336, 15
      %s340 = scalar_select %p339, %s336, 15
      %s341 = smul.addr %s340, 2
      %s342 = smul.addr %s338, 32
      %s343 = sadd.s32 %s341, %s342
      %s344 = smul.addr %s343, 8
      %s345 = scalar_lea.vmem %s5, %s344
      %s346 = smul.u32 8, %s21
      %v347 = vld [vmem:[%s314] sm:$0xff]
      %v348 = vld [vmem:[%s314 + $0x8] sm:$0xff]
      %v349 = vld [vmem:[%s314 + $0x10] sm:$0x3]
      %v350 = vld [vmem:[%s314 + $0x18] sm:$0xff]
      %v351 = vld [vmem:[%s314 + $0x20] sm:$0xff]
      %v352 = vld [vmem:[%s314 + $0x28] sm:$0x3]
      %v353 = vld [vmem:[%s314 + $0x30] sm:$0xff]
      %v354 = vld [vmem:[%s314 + $0x38] sm:$0xff]
      %v355 = vld [vmem:[%s314 + $0x40] sm:$0x3]
      %v356 = vld [vmem:[%s314 + $0x48] sm:$0xff]
      %v357 = vld [vmem:[%s314 + $0x50] sm:$0xff]
      %v358 = vld [vmem:[%s314 + $0x58] sm:$0x3]
      %v359 = vld [vmem:[%s314 + $0x60] sm:$0xff]
      %v360 = vld [vmem:[%s314 + $0x68] sm:$0xff]
      %v361 = vld [vmem:[%s314 + $0x70] sm:$0x3]
      %v362 = vld [vmem:[%s314 + $0x78] sm:$0xff]
      %v363 = vld [vmem:[%s314 + $0x80] sm:$0xff]
      %v364 = vld [vmem:[%s314 + $0x88] sm:$0x3]
      %v365 = vld [vmem:[%s314 + $0x90] sm:$0xff]
      %v366 = vld [vmem:[%s314 + $0x98] sm:$0xff]
      %v367 = vld [vmem:[%s314 + $0xa0] sm:$0x3]
      %v368 = vld [vmem:[%s314 + $0xa8] sm:$0xff]
      %v369 = vld [vmem:[%s314 + $0xb0] sm:$0xff]
      %v370 = vld [vmem:[%s314 + $0xb8] sm:$0x3]
      %v371 = vld [vmem:[%s332] sm:$0xff]
      %v372 = vld [vmem:[%s332 + $0x8] sm:$0xff]
      %v373 = vld [vmem:[%s332 + $0x10] sm:$0x3]
      %v374 = vld [vmem:[%s332 + $0x18] sm:$0xff]
      %v375 = vld [vmem:[%s332 + $0x20] sm:$0xff]
      %v376 = vld [vmem:[%s332 + $0x28] sm:$0x3]
      %v377 = vmax.f32 %v347, 0.0
      %v378 = vmax.f32 %v348, 0.0
      %v379 = vmax.f32 %v349, 0.0
      %v380 = vmax.f32 %v350, 0.0
      %v381 = vmax.f32 %v351, 0.0
      %v382 = vmax.f32 %v352, 0.0
      %v383 = vmax.f32 %v353, 0.0
      %v384 = vmax.f32 %v354, 0.0
      %v385 = vmax.f32 %v355, 0.0
      %v386 = vmax.f32 %v356, 0.0
      %v387 = vmax.f32 %v357, 0.0
      %v388 = vmax.f32 %v358, 0.0
      %v389 = vmax.f32 %v359, 0.0
      %v390 = vmax.f32 %v360, 0.0
      %v391 = vmax.f32 %v361, 0.0
      %v392 = vmax.f32 %v362, 0.0
      %v393 = vmax.f32 %v363, 0.0
      %v394 = vmax.f32 %v364, 0.0
      %v395 = vmax.f32 %v365, 0.0
      %v396 = vmax.f32 %v366, 0.0
      %v397 = vmax.f32 %v367, 0.0
      %v398 = vmax.f32 %v368, 0.0
      %v399 = vmax.f32 %v369, 0.0
      %v400 = vmax.f32 %v370, 0.0
      %v401 = vmax.f32 %v371, 0.0
      %v402 = vmax.f32 %v372, 0.0
      %v403 = vmax.f32 %v373, 0.0
      %v404 = vmax.f32 %v374, 0.0
      %v405 = vmax.f32 %v375, 0.0
      %v406 = vmax.f32 %v376, 0.0
      %v407 = vld [vmem:[%s2] sm:$0xff]
      %v408 = vld [vmem:[%s2 + $0x8] sm:$0x1]
      %v409 = vlaneseq
      %v410 = vshrl.u32 %v409, 7
      %v411 = vsub.s32 0, %v410
      %v412 = vrot.slane %v407, %v411
      %v413 = vmul.f32 %v377, %v412
      %v414 = vmul.f32 %v378, %v412
      %v415 = vmul.f32 %v380, %v412
      %v416 = vmul.f32 %v381, %v412
      %v417 = vmul.f32 %v383, %v412
      %v418 = vmul.f32 %v384, %v412
      %v419 = vmul.f32 %v386, %v412
      %v420 = vmul.f32 %v387, %v412
      %v421 = vmul.f32 %v389, %v412
      %v422 = vmul.f32 %v390, %v412
      %v423 = vmul.f32 %v392, %v412
      %v424 = vmul.f32 %v393, %v412
      %v425 = vmul.f32 %v395, %v412
      %v426 = vmul.f32 %v396, %v412
      %v427 = vmul.f32 %v398, %v412
      %v428 = vmul.f32 %v399, %v412
      %v429 = vlaneseq
      %v430 = vshrl.u32 %v429, 7
      %v431 = vsub.s32 3, %v430
      %v432 = vrot.slane %v407, %v431
      %v433 = vmul.f32 %v380, %v432
      %v434 = vmul.f32 %v381, %v432
      %v435 = vmul.f32 %v383, %v432
      %v436 = vmul.f32 %v384, %v432
      %v437 = vmul.f32 %v386, %v432
      %v438 = vmul.f32 %v387, %v432
      %v439 = vmul.f32 %v389, %v432
      %v440 = vmul.f32 %v390, %v432
      %v441 = vmul.f32 %v392, %v432
      %v442 = vmul.f32 %v393, %v432
      %v443 = vmul.f32 %v395, %v432
      %v444 = vmul.f32 %v396, %v432
      %v445 = vmul.f32 %v398, %v432
      %v446 = vmul.f32 %v399, %v432
      %v447 = vmul.f32 %v401, %v432
      %v448 = vmul.f32 %v402, %v432
      %v449 = vadd.f32 %v413, %v433
      %v450 = vadd.f32 %v414, %v434
      %v451 = vadd.f32 %v415, %v435
      %v452 = vadd.f32 %v416, %v436
      %v453 = vadd.f32 %v417, %v437
      %v454 = vadd.f32 %v418, %v438
      %v455 = vadd.f32 %v419, %v439
      %v456 = vadd.f32 %v420, %v440
      %v457 = vadd.f32 %v421, %v441
      %v458 = vadd.f32 %v422, %v442
      %v459 = vadd.f32 %v423, %v443
      %v460 = vadd.f32 %v424, %v444
      %v461 = vadd.f32 %v425, %v445
      %v462 = vadd.f32 %v426, %v446
      %v463 = vadd.f32 %v427, %v447
      %v464 = vadd.f32 %v428, %v448
      %v465 = vlaneseq
      %v466 = vshrl.u32 %v465, 7
      %v467 = vsub.s32 6, %v466
      %v468 = vrot.slane %v407, %v467
      %v469 = vmul.f32 %v383, %v468
      %v470 = vmul.f32 %v384, %v468
      %v471 = vmul.f32 %v386, %v468
      %v472 = vmul.f32 %v387, %v468
      %v473 = vmul.f32 %v389, %v468
      %v474 = vmul.f32 %v390, %v468
      %v475 = vmul.f32 %v392, %v468
      %v476 = vmul.f32 %v393, %v468
      %v477 = vmul.f32 %v395, %v468
      %v478 = vmul.f32 %v396, %v468
      %v479 = vmul.f32 %v398, %v468
      %v480 = vmul.f32 %v399, %v468
      %v481 = vmul.f32 %v401, %v468
      %v482 = vmul.f32 %v402, %v468
      %v483 = vmul.f32 %v404, %v468
      %v484 = vmul.f32 %v405, %v468
      %v485 = vadd.f32 %v449, %v469
      %v486 = vadd.f32 %v450, %v470
      %v487 = vadd.f32 %v451, %v471
      %v488 = vadd.f32 %v452, %v472
      %v489 = vadd.f32 %v453, %v473
      %v490 = vadd.f32 %v454, %v474
      %v491 = vadd.f32 %v455, %v475
      %v492 = vadd.f32 %v456, %v476
      %v493 = vadd.f32 %v457, %v477
      %v494 = vadd.f32 %v458, %v478
      %v495 = vadd.f32 %v459, %v479
      %v496 = vadd.f32 %v460, %v480
      %v497 = vadd.f32 %v461, %v481
      %v498 = vadd.f32 %v462, %v482
      %v499 = vadd.f32 %v463, %v483
      %v500 = vadd.f32 %v464, %v484
      %v501 = vlaneseq
      %v502 = vshrl.u32 %v501, 7
      %v503 = vsub.s32 1, %v502
      %v504 = vrot.slane %v407, %v503
      %v505 = vmul.f32 %v377, %v504
      %v506 = vmul.f32 %v378, %v504
      %v507 = vmul.f32 %v379, %v504
      %v508 = vmul.f32 %v380, %v504
      %v509 = vmul.f32 %v381, %v504
      %v510 = vmul.f32 %v382, %v504
      %v511 = vmul.f32 %v383, %v504
      %v512 = vmul.f32 %v384, %v504
      %v513 = vmul.f32 %v385, %v504
      %v514 = vmul.f32 %v386, %v504
      %v515 = vmul.f32 %v387, %v504
      %v516 = vmul.f32 %v388, %v504
      %v517 = vmul.f32 %v389, %v504
      %v518 = vmul.f32 %v390, %v504
      %v519 = vmul.f32 %v391, %v504
      %v520 = vmul.f32 %v392, %v504
      %v521 = vmul.f32 %v393, %v504
      %v522 = vmul.f32 %v394, %v504
      %v523 = vmul.f32 %v395, %v504
      %v524 = vmul.f32 %v396, %v504
      %v525 = vmul.f32 %v397, %v504
      %v526 = vmul.f32 %v398, %v504
      %v527 = vmul.f32 %v399, %v504
      %v528 = vmul.f32 %v400, %v504
      %vm553 = vcmask 1046528
      %v554 = vrot.slane %v505, 1
      %v555 = vrot.slane %v506, 1
      %v556 = vsel %vm553, %v554, %v555
      %v557 = vrot.slane %v507, 1
      %v558 = vsel %vm553, %v555, %v557
      %v559 = vrot.slane %v508, 1
      %v560 = vrot.slane %v509, 1
      %v561 = vsel %vm553, %v559, %v560
      %v562 = vrot.slane %v510, 1
      %v563 = vsel %vm553, %v560, %v562
      %v564 = vrot.slane %v511, 1
      %v565 = vrot.slane %v512, 1
      %v566 = vsel %vm553, %v564, %v565
      %v567 = vrot.slane %v513, 1
      %v568 = vsel %vm553, %v565, %v567
      %v569 = vrot.slane %v514, 1
      %v570 = vrot.slane %v515, 1
      %v571 = vsel %vm553, %v569, %v570
      %v572 = vrot.slane %v516, 1
      %v573 = vsel %vm553, %v570, %v572
      %v574 = vrot.slane %v517, 1
      %v575 = vrot.slane %v518, 1
      %v576 = vsel %vm553, %v574, %v575
      %v577 = vrot.slane %v519, 1
      %v578 = vsel %vm553, %v575, %v577
      %v579 = vrot.slane %v520, 1
      %v580 = vrot.slane %v521, 1
      %v581 = vsel %vm553, %v579, %v580
      %v582 = vrot.slane %v522, 1
      %v583 = vsel %vm553, %v580, %v582
      %v584 = vrot.slane %v523, 1
      %v585 = vrot.slane %v524, 1
      %v586 = vsel %vm553, %v584, %v585
      %v587 = vrot.slane %v525, 1
      %v588 = vsel %vm553, %v585, %v587
      %v589 = vrot.slane %v526, 1
      %v590 = vrot.slane %v527, 1
      %v591 = vsel %vm553, %v589, %v590
      %v592 = vrot.slane %v528, 1
      %v593 = vsel %vm553, %v590, %v592
      %v610 = vadd.f32 %v485, %v556
      %v611 = vadd.f32 %v486, %v558
      %v612 = vadd.f32 %v487, %v561
      %v613 = vadd.f32 %v488, %v563
      %v614 = vadd.f32 %v489, %v566
      %v615 = vadd.f32 %v490, %v568
      %v616 = vadd.f32 %v491, %v571
      %v617 = vadd.f32 %v492, %v573
      %v618 = vadd.f32 %v493, %v576
      %v619 = vadd.f32 %v494, %v578
      %v620 = vadd.f32 %v495, %v581
      %v621 = vadd.f32 %v496, %v583
      %v622 = vadd.f32 %v497, %v586
      %v623 = vadd.f32 %v498, %v588
      %v624 = vadd.f32 %v499, %v591
      %v625 = vadd.f32 %v500, %v593
      %v626 = vlaneseq
      %v627 = vshrl.u32 %v626, 7
      %v628 = vsub.s32 4, %v627
      %v629 = vrot.slane %v407, %v628
      %v630 = vmul.f32 %v380, %v629
      %v631 = vmul.f32 %v381, %v629
      %v632 = vmul.f32 %v382, %v629
      %v633 = vmul.f32 %v383, %v629
      %v634 = vmul.f32 %v384, %v629
      %v635 = vmul.f32 %v385, %v629
      %v636 = vmul.f32 %v386, %v629
      %v637 = vmul.f32 %v387, %v629
      %v638 = vmul.f32 %v388, %v629
      %v639 = vmul.f32 %v389, %v629
      %v640 = vmul.f32 %v390, %v629
      %v641 = vmul.f32 %v391, %v629
      %v642 = vmul.f32 %v392, %v629
      %v643 = vmul.f32 %v393, %v629
      %v644 = vmul.f32 %v394, %v629
      %v645 = vmul.f32 %v395, %v629
      %v646 = vmul.f32 %v396, %v629
      %v647 = vmul.f32 %v397, %v629
      %v648 = vmul.f32 %v398, %v629
      %v649 = vmul.f32 %v399, %v629
      %v650 = vmul.f32 %v400, %v629
      %v651 = vmul.f32 %v401, %v629
      %v652 = vmul.f32 %v402, %v629
      %v653 = vmul.f32 %v403, %v629
      %v678 = vrot.slane %v630, 1
      %v679 = vrot.slane %v631, 1
      %v680 = vsel %vm553, %v678, %v679
      %v681 = vrot.slane %v632, 1
      %v682 = vsel %vm553, %v679, %v681
      %v683 = vrot.slane %v633, 1
      %v684 = vrot.slane %v634, 1
      %v685 = vsel %vm553, %v683, %v684
      %v686 = vrot.slane %v635, 1
      %v687 = vsel %vm553, %v684, %v686
      %v688 = vrot.slane %v636, 1
      %v689 = vrot.slane %v637, 1
      %v690 = vsel %vm553, %v688, %v689
      %v691 = vrot.slane %v638, 1
      %v692 = vsel %vm553, %v689, %v691
      %v693 = vrot.slane %v639, 1
      %v694 = vrot.slane %v640, 1
      %v695 = vsel %vm553, %v693, %v694
      %v696 = vrot.slane %v641, 1
      %v697 = vsel %vm553, %v694, %v696
      %v698 = vrot.slane %v642, 1
      %v699 = vrot.slane %v643, 1
      %v700 = vsel %vm553, %v698, %v699
      %v701 = vrot.slane %v644, 1
      %v702 = vsel %vm553, %v699, %v701
      %v703 = vrot.slane %v645, 1
      %v704 = vrot.slane %v646, 1
      %v705 = vsel %vm553, %v703, %v704
      %v706 = vrot.slane %v647, 1
      %v707 = vsel %vm553, %v704, %v706
      %v708 = vrot.slane %v648, 1
      %v709 = vrot.slane %v649, 1
      %v710 = vsel %vm553, %v708, %v709
      %v711 = vrot.slane %v650, 1
      %v712 = vsel %vm553, %v709, %v711
      %v713 = vrot.slane %v651, 1
      %v714 = vrot.slane %v652, 1
      %v715 = vsel %vm553, %v713, %v714
      %v716 = vrot.slane %v653, 1
      %v717 = vsel %vm553, %v714, %v716
      %v734 = vadd.f32 %v610, %v680
      %v735 = vadd.f32 %v611, %v682
      %v736 = vadd.f32 %v612, %v685
      %v737 = vadd.f32 %v613, %v687
      %v738 = vadd.f32 %v614, %v690
      %v739 = vadd.f32 %v615, %v692
      %v740 = vadd.f32 %v616, %v695
      %v741 = vadd.f32 %v617, %v697
      %v742 = vadd.f32 %v618, %v700
      %v743 = vadd.f32 %v619, %v702
      %v744 = vadd.f32 %v620, %v705
      %v745 = vadd.f32 %v621, %v707
      %v746 = vadd.f32 %v622, %v710
      %v747 = vadd.f32 %v623, %v712
      %v748 = vadd.f32 %v624, %v715
      %v749 = vadd.f32 %v625, %v717
      %v750 = vlaneseq
      %v751 = vshrl.u32 %v750, 7
      %v752 = vsub.s32 7, %v751
      %v753 = vrot.slane %v407, %v752
      %v754 = vmul.f32 %v383, %v753
      %v755 = vmul.f32 %v384, %v753
      %v756 = vmul.f32 %v385, %v753
      %v757 = vmul.f32 %v386, %v753
      %v758 = vmul.f32 %v387, %v753
      %v759 = vmul.f32 %v388, %v753
      %v760 = vmul.f32 %v389, %v753
      %v761 = vmul.f32 %v390, %v753
      %v762 = vmul.f32 %v391, %v753
      %v763 = vmul.f32 %v392, %v753
      %v764 = vmul.f32 %v393, %v753
      %v765 = vmul.f32 %v394, %v753
      %v766 = vmul.f32 %v395, %v753
      %v767 = vmul.f32 %v396, %v753
      %v768 = vmul.f32 %v397, %v753
      %v769 = vmul.f32 %v398, %v753
      %v770 = vmul.f32 %v399, %v753
      %v771 = vmul.f32 %v400, %v753
      %v772 = vmul.f32 %v401, %v753
      %v773 = vmul.f32 %v402, %v753
      %v774 = vmul.f32 %v403, %v753
      %v775 = vmul.f32 %v404, %v753
      %v776 = vmul.f32 %v405, %v753
      %v777 = vmul.f32 %v406, %v753
      %v802 = vrot.slane %v754, 1
      %v803 = vrot.slane %v755, 1
      %v804 = vsel %vm553, %v802, %v803
      %v805 = vrot.slane %v756, 1
      %v806 = vsel %vm553, %v803, %v805
      %v807 = vrot.slane %v757, 1
      %v808 = vrot.slane %v758, 1
      %v809 = vsel %vm553, %v807, %v808
      %v810 = vrot.slane %v759, 1
      %v811 = vsel %vm553, %v808, %v810
      %v812 = vrot.slane %v760, 1
      %v813 = vrot.slane %v761, 1
      %v814 = vsel %vm553, %v812, %v813
      %v815 = vrot.slane %v762, 1
      %v816 = vsel %vm553, %v813, %v815
      %v817 = vrot.slane %v763, 1
      %v818 = vrot.slane %v764, 1
      %v819 = vsel %vm553, %v817, %v818
      %v820 = vrot.slane %v765, 1
      %v821 = vsel %vm553, %v818, %v820
      %v822 = vrot.slane %v766, 1
      %v823 = vrot.slane %v767, 1
      %v824 = vsel %vm553, %v822, %v823
      %v825 = vrot.slane %v768, 1
      %v826 = vsel %vm553, %v823, %v825
      %v827 = vrot.slane %v769, 1
      %v828 = vrot.slane %v770, 1
      %v829 = vsel %vm553, %v827, %v828
      %v830 = vrot.slane %v771, 1
      %v831 = vsel %vm553, %v828, %v830
      %v832 = vrot.slane %v772, 1
      %v833 = vrot.slane %v773, 1
      %v834 = vsel %vm553, %v832, %v833
      %v835 = vrot.slane %v774, 1
      %v836 = vsel %vm553, %v833, %v835
      %v837 = vrot.slane %v775, 1
      %v838 = vrot.slane %v776, 1
      %v839 = vsel %vm553, %v837, %v838
      %v840 = vrot.slane %v777, 1
      %v841 = vsel %vm553, %v838, %v840
      %v858 = vadd.f32 %v734, %v804
      %v859 = vadd.f32 %v735, %v806
      %v860 = vadd.f32 %v736, %v809
      %v861 = vadd.f32 %v737, %v811
      %v862 = vadd.f32 %v738, %v814
      %v863 = vadd.f32 %v739, %v816
      %v864 = vadd.f32 %v740, %v819
      %v865 = vadd.f32 %v741, %v821
      %v866 = vadd.f32 %v742, %v824
      %v867 = vadd.f32 %v743, %v826
      %v868 = vadd.f32 %v744, %v829
      %v869 = vadd.f32 %v745, %v831
      %v870 = vadd.f32 %v746, %v834
      %v871 = vadd.f32 %v747, %v836
      %v872 = vadd.f32 %v748, %v839
      %v873 = vadd.f32 %v749, %v841
      %v874 = vlaneseq
      %v875 = vshrl.u32 %v874, 7
      %v876 = vsub.s32 2, %v875
      %v877 = vrot.slane %v407, %v876
      %v878 = vmul.f32 %v377, %v877
      %v879 = vmul.f32 %v378, %v877
      %v880 = vmul.f32 %v379, %v877
      %v881 = vmul.f32 %v380, %v877
      %v882 = vmul.f32 %v381, %v877
      %v883 = vmul.f32 %v382, %v877
      %v884 = vmul.f32 %v383, %v877
      %v885 = vmul.f32 %v384, %v877
      %v886 = vmul.f32 %v385, %v877
      %v887 = vmul.f32 %v386, %v877
      %v888 = vmul.f32 %v387, %v877
      %v889 = vmul.f32 %v388, %v877
      %v890 = vmul.f32 %v389, %v877
      %v891 = vmul.f32 %v390, %v877
      %v892 = vmul.f32 %v391, %v877
      %v893 = vmul.f32 %v392, %v877
      %v894 = vmul.f32 %v393, %v877
      %v895 = vmul.f32 %v394, %v877
      %v896 = vmul.f32 %v395, %v877
      %v897 = vmul.f32 %v396, %v877
      %v898 = vmul.f32 %v397, %v877
      %v899 = vmul.f32 %v398, %v877
      %v900 = vmul.f32 %v399, %v877
      %v901 = vmul.f32 %v400, %v877
      %vm926 = vcmask 1045504
      %v927 = vrot.slane %v878, 2
      %v928 = vrot.slane %v879, 2
      %v929 = vsel %vm926, %v927, %v928
      %v930 = vrot.slane %v880, 2
      %v931 = vsel %vm926, %v928, %v930
      %v932 = vrot.slane %v881, 2
      %v933 = vrot.slane %v882, 2
      %v934 = vsel %vm926, %v932, %v933
      %v935 = vrot.slane %v883, 2
      %v936 = vsel %vm926, %v933, %v935
      %v937 = vrot.slane %v884, 2
      %v938 = vrot.slane %v885, 2
      %v939 = vsel %vm926, %v937, %v938
      %v940 = vrot.slane %v886, 2
      %v941 = vsel %vm926, %v938, %v940
      %v942 = vrot.slane %v887, 2
      %v943 = vrot.slane %v888, 2
      %v944 = vsel %vm926, %v942, %v943
      %v945 = vrot.slane %v889, 2
      %v946 = vsel %vm926, %v943, %v945
      %v947 = vrot.slane %v890, 2
      %v948 = vrot.slane %v891, 2
      %v949 = vsel %vm926, %v947, %v948
      %v950 = vrot.slane %v892, 2
      %v951 = vsel %vm926, %v948, %v950
      %v952 = vrot.slane %v893, 2
      %v953 = vrot.slane %v894, 2
      %v954 = vsel %vm926, %v952, %v953
      %v955 = vrot.slane %v895, 2
      %v956 = vsel %vm926, %v953, %v955
      %v957 = vrot.slane %v896, 2
      %v958 = vrot.slane %v897, 2
      %v959 = vsel %vm926, %v957, %v958
      %v960 = vrot.slane %v898, 2
      %v961 = vsel %vm926, %v958, %v960
      %v962 = vrot.slane %v899, 2
      %v963 = vrot.slane %v900, 2
      %v964 = vsel %vm926, %v962, %v963
      %v965 = vrot.slane %v901, 2
      %v966 = vsel %vm926, %v963, %v965
      %v983 = vadd.f32 %v858, %v929
      %v984 = vadd.f32 %v859, %v931
      %v985 = vadd.f32 %v860, %v934
      %v986 = vadd.f32 %v861, %v936
      %v987 = vadd.f32 %v862, %v939
      %v988 = vadd.f32 %v863, %v941
      %v989 = vadd.f32 %v864, %v944
      %v990 = vadd.f32 %v865, %v946
      %v991 = vadd.f32 %v866, %v949
      %v992 = vadd.f32 %v867, %v951
      %v993 = vadd.f32 %v868, %v954
      %v994 = vadd.f32 %v869, %v956
      %v995 = vadd.f32 %v870, %v959
      %v996 = vadd.f32 %v871, %v961
      %v997 = vadd.f32 %v872, %v964
      %v998 = vadd.f32 %v873, %v966
      %v999 = vlaneseq
      %v1000 = vshrl.u32 %v999, 7
      %v1001 = vsub.s32 5, %v1000
      %v1002 = vrot.slane %v407, %v1001
      %v1003 = vmul.f32 %v380, %v1002
      %v1004 = vmul.f32 %v381, %v1002
      %v1005 = vmul.f32 %v382, %v1002
      %v1006 = vmul.f32 %v383, %v1002
      %v1007 = vmul.f32 %v384, %v1002
      %v1008 = vmul.f32 %v385, %v1002
      %v1009 = vmul.f32 %v386, %v1002
      %v1010 = vmul.f32 %v387, %v1002
      %v1011 = vmul.f32 %v388, %v1002
      %v1012 = vmul.f32 %v389, %v1002
      %v1013 = vmul.f32 %v390, %v1002
      %v1014 = vmul.f32 %v391, %v1002
      %v1015 = vmul.f32 %v392, %v1002
      %v1016 = vmul.f32 %v393, %v1002
      %v1017 = vmul.f32 %v394, %v1002
      %v1018 = vmul.f32 %v395, %v1002
      %v1019 = vmul.f32 %v396, %v1002
      %v1020 = vmul.f32 %v397, %v1002
      %v1021 = vmul.f32 %v398, %v1002
      %v1022 = vmul.f32 %v399, %v1002
      %v1023 = vmul.f32 %v400, %v1002
      %v1024 = vmul.f32 %v401, %v1002
      %v1025 = vmul.f32 %v402, %v1002
      %v1026 = vmul.f32 %v403, %v1002
      %v1051 = vrot.slane %v1003, 2
      %v1052 = vrot.slane %v1004, 2
      %v1053 = vsel %vm926, %v1051, %v1052
      %v1054 = vrot.slane %v1005, 2
      %v1055 = vsel %vm926, %v1052, %v1054
      %v1056 = vrot.slane %v1006, 2
      %v1057 = vrot.slane %v1007, 2
      %v1058 = vsel %vm926, %v1056, %v1057
      %v1059 = vrot.slane %v1008, 2
      %v1060 = vsel %vm926, %v1057, %v1059
      %v1061 = vrot.slane %v1009, 2
      %v1062 = vrot.slane %v1010, 2
      %v1063 = vsel %vm926, %v1061, %v1062
      %v1064 = vrot.slane %v1011, 2
      %v1065 = vsel %vm926, %v1062, %v1064
      %v1066 = vrot.slane %v1012, 2
      %v1067 = vrot.slane %v1013, 2
      %v1068 = vsel %vm926, %v1066, %v1067
      %v1069 = vrot.slane %v1014, 2
      %v1070 = vsel %vm926, %v1067, %v1069
      %v1071 = vrot.slane %v1015, 2
      %v1072 = vrot.slane %v1016, 2
      %v1073 = vsel %vm926, %v1071, %v1072
      %v1074 = vrot.slane %v1017, 2
      %v1075 = vsel %vm926, %v1072, %v1074
      %v1076 = vrot.slane %v1018, 2
      %v1077 = vrot.slane %v1019, 2
      %v1078 = vsel %vm926, %v1076, %v1077
      %v1079 = vrot.slane %v1020, 2
      %v1080 = vsel %vm926, %v1077, %v1079
      %v1081 = vrot.slane %v1021, 2
      %v1082 = vrot.slane %v1022, 2
      %v1083 = vsel %vm926, %v1081, %v1082
      %v1084 = vrot.slane %v1023, 2
      %v1085 = vsel %vm926, %v1082, %v1084
      %v1086 = vrot.slane %v1024, 2
      %v1087 = vrot.slane %v1025, 2
      %v1088 = vsel %vm926, %v1086, %v1087
      %v1089 = vrot.slane %v1026, 2
      %v1090 = vsel %vm926, %v1087, %v1089
      %v1107 = vadd.f32 %v983, %v1053
      %v1108 = vadd.f32 %v984, %v1055
      %v1109 = vadd.f32 %v985, %v1058
      %v1110 = vadd.f32 %v986, %v1060
      %v1111 = vadd.f32 %v987, %v1063
      %v1112 = vadd.f32 %v988, %v1065
      %v1113 = vadd.f32 %v989, %v1068
      %v1114 = vadd.f32 %v990, %v1070
      %v1115 = vadd.f32 %v991, %v1073
      %v1116 = vadd.f32 %v992, %v1075
      %v1117 = vadd.f32 %v993, %v1078
      %v1118 = vadd.f32 %v994, %v1080
      %v1119 = vadd.f32 %v995, %v1083
      %v1120 = vadd.f32 %v996, %v1085
      %v1121 = vadd.f32 %v997, %v1088
      %v1122 = vadd.f32 %v998, %v1090
      %v1123 = vlaneseq
      %v1124 = vshrl.u32 %v1123, 7
      %v1125 = vsub.s32 0, %v1124
      %v1126 = vrot.slane %v408, %v1125
      %v1127 = vmul.f32 %v383, %v1126
      %v1128 = vmul.f32 %v384, %v1126
      %v1129 = vmul.f32 %v385, %v1126
      %v1130 = vmul.f32 %v386, %v1126
      %v1131 = vmul.f32 %v387, %v1126
      %v1132 = vmul.f32 %v388, %v1126
      %v1133 = vmul.f32 %v389, %v1126
      %v1134 = vmul.f32 %v390, %v1126
      %v1135 = vmul.f32 %v391, %v1126
      %v1136 = vmul.f32 %v392, %v1126
      %v1137 = vmul.f32 %v393, %v1126
      %v1138 = vmul.f32 %v394, %v1126
      %v1139 = vmul.f32 %v395, %v1126
      %v1140 = vmul.f32 %v396, %v1126
      %v1141 = vmul.f32 %v397, %v1126
      %v1142 = vmul.f32 %v398, %v1126
      %v1143 = vmul.f32 %v399, %v1126
      %v1144 = vmul.f32 %v400, %v1126
      %v1145 = vmul.f32 %v401, %v1126
      %v1146 = vmul.f32 %v402, %v1126
      %v1147 = vmul.f32 %v403, %v1126
      %v1148 = vmul.f32 %v404, %v1126
      %v1149 = vmul.f32 %v405, %v1126
      %v1150 = vmul.f32 %v406, %v1126
      %v1175 = vrot.slane %v1127, 2
      %v1176 = vrot.slane %v1128, 2
      %v1177 = vsel %vm926, %v1175, %v1176
      %v1178 = vrot.slane %v1129, 2
      %v1179 = vsel %vm926, %v1176, %v1178
      %v1180 = vrot.slane %v1130, 2
      %v1181 = vrot.slane %v1131, 2
      %v1182 = vsel %vm926, %v1180, %v1181
      %v1183 = vrot.slane %v1132, 2
      %v1184 = vsel %vm926, %v1181, %v1183
      %v1185 = vrot.slane %v1133, 2
      %v1186 = vrot.slane %v1134, 2
      %v1187 = vsel %vm926, %v1185, %v1186
      %v1188 = vrot.slane %v1135, 2
      %v1189 = vsel %vm926, %v1186, %v1188
      %v1190 = vrot.slane %v1136, 2
      %v1191 = vrot.slane %v1137, 2
      %v1192 = vsel %vm926, %v1190, %v1191
      %v1193 = vrot.slane %v1138, 2
      %v1194 = vsel %vm926, %v1191, %v1193
      %v1195 = vrot.slane %v1139, 2
      %v1196 = vrot.slane %v1140, 2
      %v1197 = vsel %vm926, %v1195, %v1196
      %v1198 = vrot.slane %v1141, 2
      %v1199 = vsel %vm926, %v1196, %v1198
      %v1200 = vrot.slane %v1142, 2
      %v1201 = vrot.slane %v1143, 2
      %v1202 = vsel %vm926, %v1200, %v1201
      %v1203 = vrot.slane %v1144, 2
      %v1204 = vsel %vm926, %v1201, %v1203
      %v1205 = vrot.slane %v1145, 2
      %v1206 = vrot.slane %v1146, 2
      %v1207 = vsel %vm926, %v1205, %v1206
      %v1208 = vrot.slane %v1147, 2
      %v1209 = vsel %vm926, %v1206, %v1208
      %v1210 = vrot.slane %v1148, 2
      %v1211 = vrot.slane %v1149, 2
      %v1212 = vsel %vm926, %v1210, %v1211
      %v1213 = vrot.slane %v1150, 2
      %v1214 = vsel %vm926, %v1211, %v1213
      %v1231 = vadd.f32 %v1107, %v1177
      %v1232 = vadd.f32 %v1108, %v1179
      %v1233 = vadd.f32 %v1109, %v1182
      %v1234 = vadd.f32 %v1110, %v1184
      %v1235 = vadd.f32 %v1111, %v1187
      %v1236 = vadd.f32 %v1112, %v1189
      %v1237 = vadd.f32 %v1113, %v1192
      %v1238 = vadd.f32 %v1114, %v1194
      %v1239 = vadd.f32 %v1115, %v1197
      %v1240 = vadd.f32 %v1116, %v1199
      %v1241 = vadd.f32 %v1117, %v1202
      %v1242 = vadd.f32 %v1118, %v1204
      %v1243 = vadd.f32 %v1119, %v1207
      %v1244 = vadd.f32 %v1120, %v1209
      %v1245 = vadd.f32 %v1121, %v1212
      %v1246 = vadd.f32 %v1122, %v1214
      %v1247 = vld [vmem:[%s3] sm:$0xf]
      %v1248 = vld [vmem:[%s4] sm:$0x1]
      %v1250 = vlaneseq
      %v1251 = vshrl.u32 %v1250, 7
      %v1252 = vsub.s32 0, %v1251
      %v1253 = vrot.slane %v1248, %v1252
      %vm1255 = vcmask 31744
      %v1257 = vsel %vm1255, %v1231, 0
      %v1260 = vsel %vm1255, %v1232, 0
      %v1263 = vsel %vm1255, %v1233, 0
      %v1266 = vsel %vm1255, %v1234, 0
      %v1269 = vsel %vm1255, %v1235, 0
      %v1272 = vsel %vm1255, %v1236, 0
      %v1275 = vsel %vm1255, %v1237, 0
      %v1278 = vsel %vm1255, %v1238, 0
      %v1281 = vsel %vm1255, %v1239, 0
      %v1284 = vsel %vm1255, %v1240, 0
      %v1287 = vsel %vm1255, %v1241, 0
      %v1290 = vsel %vm1255, %v1242, 0
      %v1293 = vsel %vm1255, %v1243, 0
      %v1296 = vsel %vm1255, %v1244, 0
      %v1299 = vsel %vm1255, %v1245, 0
      %v1302 = vsel %vm1255, %v1246, 0
      %vm1304 = vcmask 1043456
      %v1306 = vsel %vm1304, %v1247, 0
      %1308 = vmatprep.subr.mxu0 0.0
      %v1309 = vand.u32 %v1306, 4294901760
      %1310 = vmatpush1.msra.mxu0 %v1309
      %1311 = vmatprep.subr.mxu0 0.0
      %1312 = vmatpush1.msra.mxu0 0.0
      %1313 = vmatprep.subr.mxu0 0.0
      %1314 = vmatpush1.msra.mxu0 0.0
      %1315 = vmatprep.subr.mxu0 0.0
      %1316 = vmatpush1.msra.mxu0 0.0
      %1317 = vmatprep.subr.mxu0 0.0
      %1318 = vmatpush1.msra.mxu0 0.0
      %1319 = vmatprep.subr.mxu0 0.0
      %1320 = vmatpush1.msra.mxu0 0.0
      %1321 = vmatprep.subr.mxu0 0.0
      %1322 = vmatpush1.msra.mxu0 0.0
      %1323 = vmatprep.subr.mxu0 0.0
      %1324 = vmatpush1.msra.mxu0 0.0
      %1325 = vmatprep.subr.mxu0 0.0
      %1326 = vmatpush1.msra.mxu0 0.0
      %1327 = vmatprep.subr.mxu0 0.0
      %1328 = vmatpush1.msra.mxu0 0.0
      %1329 = vmatprep.subr.mxu0 0.0
      %1330 = vmatpush1.msra.mxu0 0.0
      %1331 = vmatprep.subr.mxu0 0.0
      %1332 = vmatpush1.msra.mxu0 0.0
      %1333 = vmatprep.subr.mxu0 0.0
      %1334 = vmatpush1.msra.mxu0 0.0
      %1335 = vmatprep.subr.mxu0 0.0
      %1336 = vmatpush1.msra.mxu0 0.0
      %1337 = vmatprep.subr.mxu0 0.0
      %1338 = vmatpush1.msra.mxu0 0.0
      %1339 = vmatprep.subr.mxu0 0.0
      %1340 = vmatpush1.msra.mxu0 0.0
      %1341 = vmatprep.subr.mxu0 0.0
      %1342 = vmatpush1.msra.mxu0 0.0
      %1343 = vmatprep.subr.mxu0 0.0
      %1344 = vmatpush1.msra.mxu0 0.0
      %1345 = vmatprep.subr.mxu0 0.0
      %1346 = vmatpush1.msra.mxu0 0.0
      %1347 = vmatprep.subr.mxu0 0.0
      %1348 = vmatpush1.msra.mxu0 0.0
      %1349 = vmatprep.subr.mxu0 0.0
      %1350 = vmatpush1.msra.mxu0 0.0
      %1351 = vmatprep.subr.mxu0 0.0
      %1352 = vmatpush1.msra.mxu0 0.0
      %1353 = vmatprep.subr.mxu0 0.0
      %1354 = vmatpush1.msra.mxu0 0.0
      %1355 = vmatprep.subr.mxu0 0.0
      %1356 = vmatpush1.msra.mxu0 0.0
      %1357 = vmatprep.subr.mxu0 0.0
      %1358 = vmatpush1.msra.mxu0 0.0
      %1359 = vmatprep.subr.mxu0 0.0
      %1360 = vmatpush1.msra.mxu0 0.0
      %1361 = vmatprep.subr.mxu0 0.0
      %1362 = vmatpush1.msra.mxu0 0.0
      %1363 = vmatprep.subr.mxu0 0.0
      %1364 = vmatpush1.msra.mxu0 0.0
      %1365 = vmatprep.subr.mxu0 0.0
      %1366 = vmatpush1.msra.mxu0 0.0
      %1367 = vmatprep.subr.mxu0 0.0
      %1368 = vmatpush1.msra.mxu0 0.0
      %1369 = vmatprep.subr.mxu0 0.0
      %1370 = vmatpush1.msra.mxu0 0.0
      %1371 = vmatprep.subr.mxu0 0.0
      %1372 = vmatpush1.msra.mxu0 0.0
      %1373 = vmatprep.mubr.f32.mxu0 0.0
      %v1374 = vand.u32 %v1257, 4294901760
      %v1375 = vsub.f32 %v1257, %v1374
      %v1376 = vand.u32 %v1375, 4294901760
      %v1377 = vsub.f32 %v1375, %v1376
      %v1378 = vand.u32 %v1377, 4294901760
      %1379 = vmatmul.mubr.f32.gmra.mrb[0].mxu0 %v1378
      %v1380 = vpop.f32.mrb[0].mxu0
      %v1381 = vadd.f32 %v1253, %v1380
      %v1382 = vpop.f32.mrb[0].mxu0
      %1383 = vmatprep.mubr.f32.mxu0 0.0
      %v1384 = vand.u32 %v1260, 4294901760
      %v1385 = vsub.f32 %v1260, %v1384
      %v1386 = vand.u32 %v1385, 4294901760
      %v1387 = vsub.f32 %v1385, %v1386
      %v1388 = vand.u32 %v1387, 4294901760
      %1389 = vmatmul.mubr.f32.gmra.mrb[0].mxu0 %v1388
      %v1390 = vpop.f32.mrb[0].mxu0
      %v1391 = vadd.f32 %v1253, %v1390
      %v1392 = vpop.f32.mrb[0].mxu0
      %1393 = vmatprep.mubr.f32.mxu0 0.0
      %v1394 = vand.u32 %v1263, 4294901760
      %v1395 = vsub.f32 %v1263, %v1394
      %v1396 = vand.u32 %v1395, 4294901760
      %v1397 = vsub.f32 %v1395, %v1396
      %v1398 = vand.u32 %v1397, 4294901760
      %1399 = vmatmul.mubr.f32.gmra.mrb[0].mxu0 %v1398
      %v1400 = vpop.f32.mrb[0].mxu0
      %v1401 = vadd.f32 %v1253, %v1400
      %v1402 = vpop.f32.mrb[0].mxu0
      %1403 = vmatprep.mubr.f32.mxu0 0.0
      %v1404 = vand.u32 %v1266, 4294901760
      %v1405 = vsub.f32 %v1266, %v1404
      %v1406 = vand.u32 %v1405, 4294901760
      %v1407 = vsub.f32 %v1405, %v1406
      %v1408 = vand.u32 %v1407, 4294901760
      %1409 = vmatmul.mubr.f32.gmra.mrb[0].mxu0 %v1408
      %v1410 = vpop.f32.mrb[0].mxu0
      %v1411 = vadd.f32 %v1253, %v1410
      %v1412 = vpop.f32.mrb[0].mxu0
      %1413 = vmatprep.mubr.f32.mxu0 0.0
      %v1414 = vand.u32 %v1269, 4294901760
      %v1415 = vsub.f32 %v1269, %v1414
      %v1416 = vand.u32 %v1415, 4294901760
      %v1417 = vsub.f32 %v1415, %v1416
      %v1418 = vand.u32 %v1417, 4294901760
      %1419 = vmatmul.mubr.f32.gmra.mrb[0].mxu0 %v1418
      %v1420 = vpop.f32.mrb[0].mxu0
      %v1421 = vadd.f32 %v1253, %v1420
      %v1422 = vpop.f32.mrb[0].mxu0
      %1423 = vmatprep.mubr.f32.mxu0 0.0
      %v1424 = vand.u32 %v1272, 4294901760
      %v1425 = vsub.f32 %v1272, %v1424
      %v1426 = vand.u32 %v1425, 4294901760
      %v1427 = vsub.f32 %v1425, %v1426
      %v1428 = vand.u32 %v1427, 4294901760
      %1429 = vmatmul.mubr.f32.gmra.mrb[0].mxu0 %v1428
      %v1430 = vpop.f32.mrb[0].mxu0
      %v1431 = vadd.f32 %v1253, %v1430
      %v1432 = vpop.f32.mrb[0].mxu0
      %1433 = vmatprep.mubr.f32.mxu0 0.0
      %v1434 = vand.u32 %v1275, 4294901760
      %v1435 = vsub.f32 %v1275, %v1434
      %v1436 = vand.u32 %v1435, 4294901760
      %v1437 = vsub.f32 %v1435, %v1436
      %v1438 = vand.u32 %v1437, 4294901760
      %1439 = vmatmul.mubr.f32.gmra.mrb[0].mxu0 %v1438
      %v1440 = vpop.f32.mrb[0].mxu0
      %v1441 = vadd.f32 %v1253, %v1440
      %v1442 = vpop.f32.mrb[0].mxu0
      %1443 = vmatprep.mubr.f32.mxu0 0.0
      %v1444 = vand.u32 %v1278, 4294901760
      %v1445 = vsub.f32 %v1278, %v1444
      %v1446 = vand.u32 %v1445, 4294901760
      %v1447 = vsub.f32 %v1445, %v1446
      %v1448 = vand.u32 %v1447, 4294901760
      %1449 = vmatmul.mubr.f32.gmra.mrb[0].mxu0 %v1448
      %v1450 = vpop.f32.mrb[0].mxu0
      %v1451 = vadd.f32 %v1253, %v1450
      %v1452 = vpop.f32.mrb[0].mxu0
      %1453 = vmatprep.mubr.f32.mxu0 0.0
      %v1454 = vand.u32 %v1281, 4294901760
      %v1455 = vsub.f32 %v1281, %v1454
      %v1456 = vand.u32 %v1455, 4294901760
      %v1457 = vsub.f32 %v1455, %v1456
      %v1458 = vand.u32 %v1457, 4294901760
      %1459 = vmatmul.mubr.f32.gmra.mrb[0].mxu0 %v1458
      %v1460 = vpop.f32.mrb[0].mxu0
      %v1461 = vadd.f32 %v1253, %v1460
      %v1462 = vpop.f32.mrb[0].mxu0
      %1463 = vmatprep.mubr.f32.mxu0 0.0
      %v1464 = vand.u32 %v1284, 4294901760
      %v1465 = vsub.f32 %v1284, %v1464
      %v1466 = vand.u32 %v1465, 4294901760
      %v1467 = vsub.f32 %v1465, %v1466
      %v1468 = vand.u32 %v1467, 4294901760
      %1469 = vmatmul.mubr.f32.gmra.mrb[0].mxu0 %v1468
      %v1470 = vpop.f32.mrb[0].mxu0
      %v1471 = vadd.f32 %v1253, %v1470
      %v1472 = vpop.f32.mrb[0].mxu0
      %1473 = vmatprep.mubr.f32.mxu0 0.0
      %v1474 = vand.u32 %v1287, 4294901760
      %v1475 = vsub.f32 %v1287, %v1474
      %v1476 = vand.u32 %v1475, 4294901760
      %v1477 = vsub.f32 %v1475, %v1476
      %v1478 = vand.u32 %v1477, 4294901760
      %1479 = vmatmul.mubr.f32.gmra.mrb[0].mxu0 %v1478
      %v1480 = vpop.f32.mrb[0].mxu0
      %v1481 = vadd.f32 %v1253, %v1480
      %v1482 = vpop.f32.mrb[0].mxu0
      %1483 = vmatprep.mubr.f32.mxu0 0.0
      %v1484 = vand.u32 %v1290, 4294901760
      %v1485 = vsub.f32 %v1290, %v1484
      %v1486 = vand.u32 %v1485, 4294901760
      %v1487 = vsub.f32 %v1485, %v1486
      %v1488 = vand.u32 %v1487, 4294901760
      %1489 = vmatmul.mubr.f32.gmra.mrb[0].mxu0 %v1488
      %v1490 = vpop.f32.mrb[0].mxu0
      %v1491 = vadd.f32 %v1253, %v1490
      %v1492 = vpop.f32.mrb[0].mxu0
      %1493 = vmatprep.mubr.f32.mxu0 0.0
      %v1494 = vand.u32 %v1293, 4294901760
      %v1495 = vsub.f32 %v1293, %v1494
      %v1496 = vand.u32 %v1495, 4294901760
      %v1497 = vsub.f32 %v1495, %v1496
      %v1498 = vand.u32 %v1497, 4294901760
      %1499 = vmatmul.mubr.f32.gmra.mrb[0].mxu0 %v1498
      %v1500 = vpop.f32.mrb[0].mxu0
      %v1501 = vadd.f32 %v1253, %v1500
      %v1502 = vpop.f32.mrb[0].mxu0
      %1503 = vmatprep.mubr.f32.mxu0 0.0
      %v1504 = vand.u32 %v1296, 4294901760
      %v1505 = vsub.f32 %v1296, %v1504
      %v1506 = vand.u32 %v1505, 4294901760
      %v1507 = vsub.f32 %v1505, %v1506
      %v1508 = vand.u32 %v1507, 4294901760
      %1509 = vmatmul.mubr.f32.gmra.mrb[0].mxu0 %v1508
      %v1510 = vpop.f32.mrb[0].mxu0
      %v1511 = vadd.f32 %v1253, %v1510
      %v1512 = vpop.f32.mrb[0].mxu0
      %1513 = vmatprep.mubr.f32.mxu0 0.0
      %v1514 = vand.u32 %v1299, 4294901760
      %v1515 = vsub.f32 %v1299, %v1514
      %v1516 = vand.u32 %v1515, 4294901760
      %v1517 = vsub.f32 %v1515, %v1516
      %v1518 = vand.u32 %v1517, 4294901760
      %1519 = vmatmul.mubr.f32.gmra.mrb[0].mxu0 %v1518
      %v1520 = vpop.f32.mrb[0].mxu0
      %v1521 = vadd.f32 %v1253, %v1520
      %v1522 = vpop.f32.mrb[0].mxu0
      %1523 = vmatprep.mubr.f32.mxu0 0.0
      %v1524 = vand.u32 %v1302, 4294901760
      %v1525 = vsub.f32 %v1302, %v1524
      %v1526 = vand.u32 %v1525, 4294901760
      %v1527 = vsub.f32 %v1525, %v1526
      %v1528 = vand.u32 %v1527, 4294901760
      %1529 = vmatmul.mubr.f32.gmra.mrb[0].mxu0 %v1528
      %v1530 = vpop.f32.mrb[0].mxu0
      %v1531 = vadd.f32 %v1253, %v1530
      %v1532 = vpop.f32.mrb[0].mxu0
      %1533 = vdwg.mxu0
      %1534 = vmatprep.subr.mxu0 0.0
      %v1535 = vand.u32 %v1306, 4294901760
      %v1536 = vsub.f32 %v1306, %v1535
      %v1537 = vand.u32 %v1536, 4294901760
      %v1538 = vsub.f32 %v1536, %v1537
      %v1539 = vand.u32 %v1538, 4294901760
      %1540 = vmatpush1.msra.mxu0 %v1539
      %1541 = vmatprep.subr.mxu0 0.0
      %1542 = vmatpush1.msra.mxu0 0.0
      %1543 = vmatprep.subr.mxu0 0.0
      %1544 = vmatpush1.msra.mxu0 0.0
      %1545 = vmatprep.subr.mxu0 0.0
      %1546 = vmatpush1.msra.mxu0 0.0
      %1547 = vmatprep.subr.mxu0 0.0
      %1548 = vmatpush1.msra.mxu0 0.0
      %1549 = vmatprep.subr.mxu0 0.0
      %1550 = vmatpush1.msra.mxu0 0.0
      %1551 = vmatprep.subr.mxu0 0.0
      %1552 = vmatpush1.msra.mxu0 0.0
      %1553 = vmatprep.subr.mxu0 0.0
      %1554 = vmatpush1.msra.mxu0 0.0
      %1555 = vmatprep.subr.mxu0 0.0
      %1556 = vmatpush1.msra.mxu0 0.0
      %1557 = vmatprep.subr.mxu0 0.0
      %1558 = vmatpush1.msra.mxu0 0.0
      %1559 = vmatprep.subr.mxu0 0.0
      %1560 = vmatpush1.msra.mxu0 0.0
      %1561 = vmatprep.subr.mxu0 0.0
      %1562 = vmatpush1.msra.mxu0 0.0
      %1563 = vmatprep.subr.mxu0 0.0
      %1564 = vmatpush1.msra.mxu0 0.0
      %1565 = vmatprep.subr.mxu0 0.0
      %1566 = vmatpush1.msra.mxu0 0.0
      %1567 = vmatprep.subr.mxu0 0.0
      %1568 = vmatpush1.msra.mxu0 0.0
      %1569 = vmatprep.subr.mxu0 0.0
      %1570 = vmatpush1.msra.mxu0 0.0
      %1571 = vmatprep.subr.mxu0 0.0
      %1572 = vmatpush1.msra.mxu0 0.0
      %1573 = vmatprep.subr.mxu0 0.0
      %1574 = vmatpush1.msra.mxu0 0.0
      %1575 = vmatprep.subr.mxu0 0.0
      %1576 = vmatpush1.msra.mxu0 0.0
      %1577 = vmatprep.subr.mxu0 0.0
      %1578 = vmatpush1.msra.mxu0 0.0
      %1579 = vmatprep.subr.mxu0 0.0
      %1580 = vmatpush1.msra.mxu0 0.0
      %1581 = vmatprep.subr.mxu0 0.0
      %1582 = vmatpush1.msra.mxu0 0.0
      %1583 = vmatprep.subr.mxu0 0.0
      %1584 = vmatpush1.msra.mxu0 0.0
      %1585 = vmatprep.subr.mxu0 0.0
      %1586 = vmatpush1.msra.mxu0 0.0
      %1587 = vmatprep.subr.mxu0 0.0
      %1588 = vmatpush1.msra.mxu0 0.0
      %1589 = vmatprep.subr.mxu0 0.0
      %1590 = vmatpush1.msra.mxu0 0.0
      %1591 = vmatprep.subr.mxu0 0.0
      %1592 = vmatpush1.msra.mxu0 0.0
      %1593 = vmatprep.subr.mxu0 0.0
      %1594 = vmatpush1.msra.mxu0 0.0
      %1595 = vmatprep.subr.mxu0 0.0
      %1596 = vmatpush1.msra.mxu0 0.0
      %1597 = vmatprep.subr.mxu0 0.0
      %1598 = vmatpush1.msra.mxu0 0.0
      %1599 = vmatprep.subr.mxu0 0.0
      %1600 = vmatpush1.msra.mxu0 0.0
      %1601 = vmatprep.subr.mxu0 0.0
      %1602 = vmatpush1.msra.mxu0 0.0
      %1603 = vmatprep.mubr.f32.mxu0 0.0
      %v1604 = vand.u32 %v1257, 4294901760
      %1605 = vmatmul.mubr.f32.gmra.mrb[0].mxu0 %v1604
      %v1606 = vpop.f32.mrb[0].mxu0
      %v1607 = vadd.f32 %v1381, %v1606
      %v1608 = vpop.f32.mrb[0].mxu0
      %1609 = vmatprep.mubr.f32.mxu0 0.0
      %v1610 = vand.u32 %v1260, 4294901760
      %1611 = vmatmul.mubr.f32.gmra.mrb[0].mxu0 %v1610
      %v1612 = vpop.f32.mrb[0].mxu0
      %v1613 = vadd.f32 %v1391, %v1612
      %v1614 = vpop.f32.mrb[0].mxu0
      %1615 = vmatprep.mubr.f32.mxu0 0.0
      %v1616 = vand.u32 %v1263, 4294901760
      %1617 = vmatmul.mubr.f32.gmra.mrb[0].mxu0 %v1616
      %v1618 = vpop.f32.mrb[0].mxu0
      %v1619 = vadd.f32 %v1401, %v1618
      %v1620 = vpop.f32.mrb[0].mxu0
      %1621 = vmatprep.mubr.f32.mxu0 0.0
      %v1622 = vand.u32 %v1266, 4294901760
      %1623 = vmatmul.mubr.f32.gmra.mrb[0].mxu0 %v1622
      %v1624 = vpop.f32.mrb[0].mxu0
      %v1625 = vadd.f32 %v1411, %v1624
      %v1626 = vpop.f32.mrb[0].mxu0
      %1627 = vmatprep.mubr.f32.mxu0 0.0
      %v1628 = vand.u32 %v1269, 4294901760
      %1629 = vmatmul.mubr.f32.gmra.mrb[0].mxu0 %v1628
      %v1630 = vpop.f32.mrb[0].mxu0
      %v1631 = vadd.f32 %v1421, %v1630
      %v1632 = vpop.f32.mrb[0].mxu0
      %1633 = vmatprep.mubr.f32.mxu0 0.0
      %v1634 = vand.u32 %v1272, 4294901760
      %1635 = vmatmul.mubr.f32.gmra.mrb[0].mxu0 %v1634
      %v1636 = vpop.f32.mrb[0].mxu0
      %v1637 = vadd.f32 %v1431, %v1636
      %v1638 = vpop.f32.mrb[0].mxu0
      %1639 = vmatprep.mubr.f32.mxu0 0.0
      %v1640 = vand.u32 %v1275, 4294901760
      %1641 = vmatmul.mubr.f32.gmra.mrb[0].mxu0 %v1640
      %v1642 = vpop.f32.mrb[0].mxu0
      %v1643 = vadd.f32 %v1441, %v1642
      %v1644 = vpop.f32.mrb[0].mxu0
      %1645 = vmatprep.mubr.f32.mxu0 0.0
      %v1646 = vand.u32 %v1278, 4294901760
      %1647 = vmatmul.mubr.f32.gmra.mrb[0].mxu0 %v1646
      %v1648 = vpop.f32.mrb[0].mxu0
      %v1649 = vadd.f32 %v1451, %v1648
      %v1650 = vpop.f32.mrb[0].mxu0
      %1651 = vmatprep.mubr.f32.mxu0 0.0
      %v1652 = vand.u32 %v1281, 4294901760
      %1653 = vmatmul.mubr.f32.gmra.mrb[0].mxu0 %v1652
      %v1654 = vpop.f32.mrb[0].mxu0
      %v1655 = vadd.f32 %v1461, %v1654
      %v1656 = vpop.f32.mrb[0].mxu0
      %1657 = vmatprep.mubr.f32.mxu0 0.0
      %v1658 = vand.u32 %v1284, 4294901760
      %1659 = vmatmul.mubr.f32.gmra.mrb[0].mxu0 %v1658
      %v1660 = vpop.f32.mrb[0].mxu0
      %v1661 = vadd.f32 %v1471, %v1660
      %v1662 = vpop.f32.mrb[0].mxu0
      %1663 = vmatprep.mubr.f32.mxu0 0.0
      %v1664 = vand.u32 %v1287, 4294901760
      %1665 = vmatmul.mubr.f32.gmra.mrb[0].mxu0 %v1664
      %v1666 = vpop.f32.mrb[0].mxu0
      %v1667 = vadd.f32 %v1481, %v1666
      %v1668 = vpop.f32.mrb[0].mxu0
      %1669 = vmatprep.mubr.f32.mxu0 0.0
      %v1670 = vand.u32 %v1290, 4294901760
      %1671 = vmatmul.mubr.f32.gmra.mrb[0].mxu0 %v1670
      %v1672 = vpop.f32.mrb[0].mxu0
      %v1673 = vadd.f32 %v1491, %v1672
      %v1674 = vpop.f32.mrb[0].mxu0
      %1675 = vmatprep.mubr.f32.mxu0 0.0
      %v1676 = vand.u32 %v1293, 4294901760
      %1677 = vmatmul.mubr.f32.gmra.mrb[0].mxu0 %v1676
      %v1678 = vpop.f32.mrb[0].mxu0
      %v1679 = vadd.f32 %v1501, %v1678
      %v1680 = vpop.f32.mrb[0].mxu0
      %1681 = vmatprep.mubr.f32.mxu0 0.0
      %v1682 = vand.u32 %v1296, 4294901760
      %1683 = vmatmul.mubr.f32.gmra.mrb[0].mxu0 %v1682
      %v1684 = vpop.f32.mrb[0].mxu0
      %v1685 = vadd.f32 %v1511, %v1684
      %v1686 = vpop.f32.mrb[0].mxu0
      %1687 = vmatprep.mubr.f32.mxu0 0.0
      %v1688 = vand.u32 %v1299, 4294901760
      %1689 = vmatmul.mubr.f32.gmra.mrb[0].mxu0 %v1688
      %v1690 = vpop.f32.mrb[0].mxu0
      %v1691 = vadd.f32 %v1521, %v1690
      %v1692 = vpop.f32.mrb[0].mxu0
      %1693 = vmatprep.mubr.f32.mxu0 0.0
      %v1694 = vand.u32 %v1302, 4294901760
      %1695 = vmatmul.mubr.f32.gmra.mrb[0].mxu0 %v1694
      %v1696 = vpop.f32.mrb[0].mxu0
      %v1697 = vadd.f32 %v1531, %v1696
      %v1698 = vpop.f32.mrb[0].mxu0
      %1699 = vdwg.mxu0
      %1700 = vmatprep.subr.mxu0 0.0
      %v1701 = vand.u32 %v1306, 4294901760
      %v1702 = vsub.f32 %v1306, %v1701
      %1703 = vmatpush1.msra.mxu0 %v1702
      %1704 = vmatprep.subr.mxu0 0.0
      %1705 = vmatpush1.msra.mxu0 0.0
      %1706 = vmatprep.subr.mxu0 0.0
      %1707 = vmatpush1.msra.mxu0 0.0
      %1708 = vmatprep.subr.mxu0 0.0
      %1709 = vmatpush1.msra.mxu0 0.0
      %1710 = vmatprep.subr.mxu0 0.0
      %1711 = vmatpush1.msra.mxu0 0.0
      %1712 = vmatprep.subr.mxu0 0.0
      %1713 = vmatpush1.msra.mxu0 0.0
      %1714 = vmatprep.subr.mxu0 0.0
      %1715 = vmatpush1.msra.mxu0 0.0
      %1716 = vmatprep.subr.mxu0 0.0
      %1717 = vmatpush1.msra.mxu0 0.0
      %1718 = vmatprep.subr.mxu0 0.0
      %1719 = vmatpush1.msra.mxu0 0.0
      %1720 = vmatprep.subr.mxu0 0.0
      %1721 = vmatpush1.msra.mxu0 0.0
      %1722 = vmatprep.subr.mxu0 0.0
      %1723 = vmatpush1.msra.mxu0 0.0
      %1724 = vmatprep.subr.mxu0 0.0
      %1725 = vmatpush1.msra.mxu0 0.0
      %1726 = vmatprep.subr.mxu0 0.0
      %1727 = vmatpush1.msra.mxu0 0.0
      %1728 = vmatprep.subr.mxu0 0.0
      %1729 = vmatpush1.msra.mxu0 0.0
      %1730 = vmatprep.subr.mxu0 0.0
      %1731 = vmatpush1.msra.mxu0 0.0
      %1732 = vmatprep.subr.mxu0 0.0
      %1733 = vmatpush1.msra.mxu0 0.0
      %1734 = vmatprep.subr.mxu0 0.0
      %1735 = vmatpush1.msra.mxu0 0.0
      %1736 = vmatprep.subr.mxu0 0.0
      %1737 = vmatpush1.msra.mxu0 0.0
      %1738 = vmatprep.subr.mxu0 0.0
      %1739 = vmatpush1.msra.mxu0 0.0
      %1740 = vmatprep.subr.mxu0 0.0
      %1741 = vmatpush1.msra.mxu0 0.0
      %1742 = vmatprep.subr.mxu0 0.0
      %1743 = vmatpush1.msra.mxu0 0.0
      %1744 = vmatprep.subr.mxu0 0.0
      %1745 = vmatpush1.msra.mxu0 0.0
      %1746 = vmatprep.subr.mxu0 0.0
      %1747 = vmatpush1.msra.mxu0 0.0
      %1748 = vmatprep.subr.mxu0 0.0
      %1749 = vmatpush1.msra.mxu0 0.0
      %1750 = vmatprep.subr.mxu0 0.0
      %1751 = vmatpush1.msra.mxu0 0.0
      %1752 = vmatprep.subr.mxu0 0.0
      %1753 = vmatpush1.msra.mxu0 0.0
      %1754 = vmatprep.subr.mxu0 0.0
      %1755 = vmatpush1.msra.mxu0 0.0
      %1756 = vmatprep.subr.mxu0 0.0
      %1757 = vmatpush1.msra.mxu0 0.0
      %1758 = vmatprep.subr.mxu0 0.0
      %1759 = vmatpush1.msra.mxu0 0.0
      %1760 = vmatprep.subr.mxu0 0.0
      %1761 = vmatpush1.msra.mxu0 0.0
      %1762 = vmatprep.subr.mxu0 0.0
      %1763 = vmatpush1.msra.mxu0 0.0
      %1764 = vmatprep.subr.mxu0 0.0
      %1765 = vmatpush1.msra.mxu0 0.0
      %1766 = vmatprep.mubr.f32.mxu0 0.0
      %v1767 = vand.u32 %v1257, 4294901760
      %v1768 = vsub.f32 %v1257, %v1767
      %1769 = vmatmul.mubr.f32.gmra.mrb[0].mxu0 %v1768
      %v1770 = vpop.f32.mrb[0].mxu0
      %v1771 = vadd.f32 %v1607, %v1770
      %v1772 = vpop.f32.mrb[0].mxu0
      %1773 = vmatprep.mubr.f32.mxu0 0.0
      %v1774 = vand.u32 %v1260, 4294901760
      %v1775 = vsub.f32 %v1260, %v1774
      %1776 = vmatmul.mubr.f32.gmra.mrb[0].mxu0 %v1775
      %v1777 = vpop.f32.mrb[0].mxu0
      %v1778 = vadd.f32 %v1613, %v1777
      %v1779 = vpop.f32.mrb[0].mxu0
      %1780 = vmatprep.mubr.f32.mxu0 0.0
      %v1781 = vand.u32 %v1263, 4294901760
      %v1782 = vsub.f32 %v1263, %v1781
      %1783 = vmatmul.mubr.f32.gmra.mrb[0].mxu0 %v1782
      %v1784 = vpop.f32.mrb[0].mxu0
      %v1785 = vadd.f32 %v1619, %v1784
      %v1786 = vpop.f32.mrb[0].mxu0
      %1787 = vmatprep.mubr.f32.mxu0 0.0
      %v1788 = vand.u32 %v1266, 4294901760
      %v1789 = vsub.f32 %v1266, %v1788
      %1790 = vmatmul.mubr.f32.gmra.mrb[0].mxu0 %v1789
      %v1791 = vpop.f32.mrb[0].mxu0
      %v1792 = vadd.f32 %v1625, %v1791
      %v1793 = vpop.f32.mrb[0].mxu0
      %1794 = vmatprep.mubr.f32.mxu0 0.0
      %v1795 = vand.u32 %v1269, 4294901760
      %v1796 = vsub.f32 %v1269, %v1795
      %1797 = vmatmul.mubr.f32.gmra.mrb[0].mxu0 %v1796
      %v1798 = vpop.f32.mrb[0].mxu0
      %v1799 = vadd.f32 %v1631, %v1798
      %v1800 = vpop.f32.mrb[0].mxu0
      %1801 = vmatprep.mubr.f32.mxu0 0.0
      %v1802 = vand.u32 %v1272, 4294901760
      %v1803 = vsub.f32 %v1272, %v1802
      %1804 = vmatmul.mubr.f32.gmra.mrb[0].mxu0 %v1803
      %v1805 = vpop.f32.mrb[0].mxu0
      %v1806 = vadd.f32 %v1637, %v1805
      %v1807 = vpop.f32.mrb[0].mxu0
      %1808 = vmatprep.mubr.f32.mxu0 0.0
      %v1809 = vand.u32 %v1275, 4294901760
      %v1810 = vsub.f32 %v1275, %v1809
      %1811 = vmatmul.mubr.f32.gmra.mrb[0].mxu0 %v1810
      %v1812 = vpop.f32.mrb[0].mxu0
      %v1813 = vadd.f32 %v1643, %v1812
      %v1814 = vpop.f32.mrb[0].mxu0
      %1815 = vmatprep.mubr.f32.mxu0 0.0
      %v1816 = vand.u32 %v1278, 4294901760
      %v1817 = vsub.f32 %v1278, %v1816
      %1818 = vmatmul.mubr.f32.gmra.mrb[0].mxu0 %v1817
      %v1819 = vpop.f32.mrb[0].mxu0
      %v1820 = vadd.f32 %v1649, %v1819
      %v1821 = vpop.f32.mrb[0].mxu0
      %1822 = vmatprep.mubr.f32.mxu0 0.0
      %v1823 = vand.u32 %v1281, 4294901760
      %v1824 = vsub.f32 %v1281, %v1823
      %1825 = vmatmul.mubr.f32.gmra.mrb[0].mxu0 %v1824
      %v1826 = vpop.f32.mrb[0].mxu0
      %v1827 = vadd.f32 %v1655, %v1826
      %v1828 = vpop.f32.mrb[0].mxu0
      %1829 = vmatprep.mubr.f32.mxu0 0.0
      %v1830 = vand.u32 %v1284, 4294901760
      %v1831 = vsub.f32 %v1284, %v1830
      %1832 = vmatmul.mubr.f32.gmra.mrb[0].mxu0 %v1831
      %v1833 = vpop.f32.mrb[0].mxu0
      %v1834 = vadd.f32 %v1661, %v1833
      %v1835 = vpop.f32.mrb[0].mxu0
      %1836 = vmatprep.mubr.f32.mxu0 0.0
      %v1837 = vand.u32 %v1287, 4294901760
      %v1838 = vsub.f32 %v1287, %v1837
      %1839 = vmatmul.mubr.f32.gmra.mrb[0].mxu0 %v1838
      %v1840 = vpop.f32.mrb[0].mxu0
      %v1841 = vadd.f32 %v1667, %v1840
      %v1842 = vpop.f32.mrb[0].mxu0
      %1843 = vmatprep.mubr.f32.mxu0 0.0
      %v1844 = vand.u32 %v1290, 4294901760
      %v1845 = vsub.f32 %v1290, %v1844
      %1846 = vmatmul.mubr.f32.gmra.mrb[0].mxu0 %v1845
      %v1847 = vpop.f32.mrb[0].mxu0
      %v1848 = vadd.f32 %v1673, %v1847
      %v1849 = vpop.f32.mrb[0].mxu0
      %1850 = vmatprep.mubr.f32.mxu0 0.0
      %v1851 = vand.u32 %v1293, 4294901760
      %v1852 = vsub.f32 %v1293, %v1851
      %1853 = vmatmul.mubr.f32.gmra.mrb[0].mxu0 %v1852
      %v1854 = vpop.f32.mrb[0].mxu0
      %v1855 = vadd.f32 %v1679, %v1854
      %v1856 = vpop.f32.mrb[0].mxu0
      %1857 = vmatprep.mubr.f32.mxu0 0.0
      %v1858 = vand.u32 %v1296, 4294901760
      %v1859 = vsub.f32 %v1296, %v1858
      %1860 = vmatmul.mubr.f32.gmra.mrb[0].mxu0 %v1859
      %v1861 = vpop.f32.mrb[0].mxu0
      %v1862 = vadd.f32 %v1685, %v1861
      %v1863 = vpop.f32.mrb[0].mxu0
      %1864 = vmatprep.mubr.f32.mxu0 0.0
      %v1865 = vand.u32 %v1299, 4294901760
      %v1866 = vsub.f32 %v1299, %v1865
      %1867 = vmatmul.mubr.f32.gmra.mrb[0].mxu0 %v1866
      %v1868 = vpop.f32.mrb[0].mxu0
      %v1869 = vadd.f32 %v1691, %v1868
      %v1870 = vpop.f32.mrb[0].mxu0
      %1871 = vmatprep.mubr.f32.mxu0 0.0
      %v1872 = vand.u32 %v1302, 4294901760
      %v1873 = vsub.f32 %v1302, %v1872
      %1874 = vmatmul.mubr.f32.gmra.mrb[0].mxu0 %v1873
      %v1875 = vpop.f32.mrb[0].mxu0
      %v1876 = vadd.f32 %v1697, %v1875
      %v1877 = vpop.f32.mrb[0].mxu0
      %1878 = vdwg.mxu0
      %1879 = vmatprep.subr.mxu0 0.0
      %v1880 = vand.u32 %v1306, 4294901760
      %1881 = vmatpush1.msra.mxu0 %v1880
      %1882 = vmatprep.subr.mxu0 0.0
      %1883 = vmatpush1.msra.mxu0 0.0
      %1884 = vmatprep.subr.mxu0 0.0
      %1885 = vmatpush1.msra.mxu0 0.0
      %1886 = vmatprep.subr.mxu0 0.0
      %1887 = vmatpush1.msra.mxu0 0.0
      %1888 = vmatprep.subr.mxu0 0.0
      %1889 = vmatpush1.msra.mxu0 0.0
      %1890 = vmatprep.subr.mxu0 0.0
      %1891 = vmatpush1.msra.mxu0 0.0
      %1892 = vmatprep.subr.mxu0 0.0
      %1893 = vmatpush1.msra.mxu0 0.0
      %1894 = vmatprep.subr.mxu0 0.0
      %1895 = vmatpush1.msra.mxu0 0.0
      %1896 = vmatprep.subr.mxu0 0.0
      %1897 = vmatpush1.msra.mxu0 0.0
      %1898 = vmatprep.subr.mxu0 0.0
      %1899 = vmatpush1.msra.mxu0 0.0
      %1900 = vmatprep.subr.mxu0 0.0
      %1901 = vmatpush1.msra.mxu0 0.0
      %1902 = vmatprep.subr.mxu0 0.0
      %1903 = vmatpush1.msra.mxu0 0.0
      %1904 = vmatprep.subr.mxu0 0.0
      %1905 = vmatpush1.msra.mxu0 0.0
      %1906 = vmatprep.subr.mxu0 0.0
      %1907 = vmatpush1.msra.mxu0 0.0
      %1908 = vmatprep.subr.mxu0 0.0
      %1909 = vmatpush1.msra.mxu0 0.0
      %1910 = vmatprep.subr.mxu0 0.0
      %1911 = vmatpush1.msra.mxu0 0.0
      %1912 = vmatprep.subr.mxu0 0.0
      %1913 = vmatpush1.msra.mxu0 0.0
      %1914 = vmatprep.subr.mxu0 0.0
      %1915 = vmatpush1.msra.mxu0 0.0
      %1916 = vmatprep.subr.mxu0 0.0
      %1917 = vmatpush1.msra.mxu0 0.0
      %1918 = vmatprep.subr.mxu0 0.0
      %1919 = vmatpush1.msra.mxu0 0.0
      %1920 = vmatprep.subr.mxu0 0.0
      %1921 = vmatpush1.msra.mxu0 0.0
      %1922 = vmatprep.subr.mxu0 0.0
      %1923 = vmatpush1.msra.mxu0 0.0
      %1924 = vmatprep.subr.mxu0 0.0
      %1925 = vmatpush1.msra.mxu0 0.0
      %1926 = vmatprep.subr.mxu0 0.0
      %1927 = vmatpush1.msra.mxu0 0.0
      %1928 = vmatprep.subr.mxu0 0.0
      %1929 = vmatpush1.msra.mxu0 0.0
      %1930 = vmatprep.subr.mxu0 0.0
      %1931 = vmatpush1.msra.mxu0 0.0
      %1932 = vmatprep.subr.mxu0 0.0
      %1933 = vmatpush1.msra.mxu0 0.0
      %1934 = vmatprep.subr.mxu0 0.0
      %1935 = vmatpush1.msra.mxu0 0.0
      %1936 = vmatprep.subr.mxu0 0.0
      %1937 = vmatpush1.msra.mxu0 0.0
      %1938 = vmatprep.subr.mxu0 0.0
      %1939 = vmatpush1.msra.mxu0 0.0
      %1940 = vmatprep.subr.mxu0 0.0
      %1941 = vmatpush1.msra.mxu0 0.0
      %1942 = vmatprep.subr.mxu0 0.0
      %1943 = vmatpush1.msra.mxu0 0.0
      %1944 = vmatprep.mubr.f32.mxu0 0.0
      %v1945 = vand.u32 %v1257, 4294901760
      %v1946 = vsub.f32 %v1257, %v1945
      %v1947 = vand.u32 %v1946, 4294901760
      %1948 = vmatmul.mubr.f32.gmra.mrb[0].mxu0 %v1947
      %v1949 = vpop.f32.mrb[0].mxu0
      %v1950 = vadd.f32 %v1771, %v1949
      %v1951 = vpop.f32.mrb[0].mxu0
      %1952 = vmatprep.mubr.f32.mxu0 0.0
      %v1953 = vand.u32 %v1260, 4294901760
      %v1954 = vsub.f32 %v1260, %v1953
      %v1955 = vand.u32 %v1954, 4294901760
      %1956 = vmatmul.mubr.f32.gmra.mrb[0].mxu0 %v1955
      %v1957 = vpop.f32.mrb[0].mxu0
      %v1958 = vadd.f32 %v1778, %v1957
      %v1959 = vpop.f32.mrb[0].mxu0
      %1960 = vmatprep.mubr.f32.mxu0 0.0
      %v1961 = vand.u32 %v1263, 4294901760
      %v1962 = vsub.f32 %v1263, %v1961
      %v1963 = vand.u32 %v1962, 4294901760
      %1964 = vmatmul.mubr.f32.gmra.mrb[0].mxu0 %v1963
      %v1965 = vpop.f32.mrb[0].mxu0
      %v1966 = vadd.f32 %v1785, %v1965
      %v1967 = vpop.f32.mrb[0].mxu0
      %1968 = vmatprep.mubr.f32.mxu0 0.0
      %v1969 = vand.u32 %v1266, 4294901760
      %v1970 = vsub.f32 %v1266, %v1969
      %v1971 = vand.u32 %v1970, 4294901760
      %1972 = vmatmul.mubr.f32.gmra.mrb[0].mxu0 %v1971
      %v1973 = vpop.f32.mrb[0].mxu0
      %v1974 = vadd.f32 %v1792, %v1973
      %v1975 = vpop.f32.mrb[0].mxu0
      %1976 = vmatprep.mubr.f32.mxu0 0.0
      %v1977 = vand.u32 %v1269, 4294901760
      %v1978 = vsub.f32 %v1269, %v1977
      %v1979 = vand.u32 %v1978, 4294901760
      %1980 = vmatmul.mubr.f32.gmra.mrb[0].mxu0 %v1979
      %v1981 = vpop.f32.mrb[0].mxu0
      %v1982 = vadd.f32 %v1799, %v1981
      %v1983 = vpop.f32.mrb[0].mxu0
      %1984 = vmatprep.mubr.f32.mxu0 0.0
      %v1985 = vand.u32 %v1272, 4294901760
      %v1986 = vsub.f32 %v1272, %v1985
      %v1987 = vand.u32 %v1986, 4294901760
      %1988 = vmatmul.mubr.f32.gmra.mrb[0].mxu0 %v1987
      %v1989 = vpop.f32.mrb[0].mxu0
      %v1990 = vadd.f32 %v1806, %v1989
      %v1991 = vpop.f32.mrb[0].mxu0
      %1992 = vmatprep.mubr.f32.mxu0 0.0
      %v1993 = vand.u32 %v1275, 4294901760
      %v1994 = vsub.f32 %v1275, %v1993
      %v1995 = vand.u32 %v1994, 4294901760
      %1996 = vmatmul.mubr.f32.gmra.mrb[0].mxu0 %v1995
      %v1997 = vpop.f32.mrb[0].mxu0
      %v1998 = vadd.f32 %v1813, %v1997
      %v1999 = vpop.f32.mrb[0].mxu0
      %2000 = vmatprep.mubr.f32.mxu0 0.0
      %v2001 = vand.u32 %v1278, 4294901760
      %v2002 = vsub.f32 %v1278, %v2001
      %v2003 = vand.u32 %v2002, 4294901760
      %2004 = vmatmul.mubr.f32.gmra.mrb[0].mxu0 %v2003
      %v2005 = vpop.f32.mrb[0].mxu0
      %v2006 = vadd.f32 %v1820, %v2005
      %v2007 = vpop.f32.mrb[0].mxu0
      %2008 = vmatprep.mubr.f32.mxu0 0.0
      %v2009 = vand.u32 %v1281, 4294901760
      %v2010 = vsub.f32 %v1281, %v2009
      %v2011 = vand.u32 %v2010, 4294901760
      %2012 = vmatmul.mubr.f32.gmra.mrb[0].mxu0 %v2011
      %v2013 = vpop.f32.mrb[0].mxu0
      %v2014 = vadd.f32 %v1827, %v2013
      %v2015 = vpop.f32.mrb[0].mxu0
      %2016 = vmatprep.mubr.f32.mxu0 0.0
      %v2017 = vand.u32 %v1284, 4294901760
      %v2018 = vsub.f32 %v1284, %v2017
      %v2019 = vand.u32 %v2018, 4294901760
      %2020 = vmatmul.mubr.f32.gmra.mrb[0].mxu0 %v2019
      %v2021 = vpop.f32.mrb[0].mxu0
      %v2022 = vadd.f32 %v1834, %v2021
      %v2023 = vpop.f32.mrb[0].mxu0
      %2024 = vmatprep.mubr.f32.mxu0 0.0
      %v2025 = vand.u32 %v1287, 4294901760
      %v2026 = vsub.f32 %v1287, %v2025
      %v2027 = vand.u32 %v2026, 4294901760
      %2028 = vmatmul.mubr.f32.gmra.mrb[0].mxu0 %v2027
      %v2029 = vpop.f32.mrb[0].mxu0
      %v2030 = vadd.f32 %v1841, %v2029
      %v2031 = vpop.f32.mrb[0].mxu0
      %2032 = vmatprep.mubr.f32.mxu0 0.0
      %v2033 = vand.u32 %v1290, 4294901760
      %v2034 = vsub.f32 %v1290, %v2033
      %v2035 = vand.u32 %v2034, 4294901760
      %2036 = vmatmul.mubr.f32.gmra.mrb[0].mxu0 %v2035
      %v2037 = vpop.f32.mrb[0].mxu0
      %v2038 = vadd.f32 %v1848, %v2037
      %v2039 = vpop.f32.mrb[0].mxu0
      %2040 = vmatprep.mubr.f32.mxu0 0.0
      %v2041 = vand.u32 %v1293, 4294901760
      %v2042 = vsub.f32 %v1293, %v2041
      %v2043 = vand.u32 %v2042, 4294901760
      %2044 = vmatmul.mubr.f32.gmra.mrb[0].mxu0 %v2043
      %v2045 = vpop.f32.mrb[0].mxu0
      %v2046 = vadd.f32 %v1855, %v2045
      %v2047 = vpop.f32.mrb[0].mxu0
      %2048 = vmatprep.mubr.f32.mxu0 0.0
      %v2049 = vand.u32 %v1296, 4294901760
      %v2050 = vsub.f32 %v1296, %v2049
      %v2051 = vand.u32 %v2050, 4294901760
      %2052 = vmatmul.mubr.f32.gmra.mrb[0].mxu0 %v2051
      %v2053 = vpop.f32.mrb[0].mxu0
      %v2054 = vadd.f32 %v1862, %v2053
      %v2055 = vpop.f32.mrb[0].mxu0
      %2056 = vmatprep.mubr.f32.mxu0 0.0
      %v2057 = vand.u32 %v1299, 4294901760
      %v2058 = vsub.f32 %v1299, %v2057
      %v2059 = vand.u32 %v2058, 4294901760
      %2060 = vmatmul.mubr.f32.gmra.mrb[0].mxu0 %v2059
      %v2061 = vpop.f32.mrb[0].mxu0
      %v2062 = vadd.f32 %v1869, %v2061
      %v2063 = vpop.f32.mrb[0].mxu0
      %2064 = vmatprep.mubr.f32.mxu0 0.0
      %v2065 = vand.u32 %v1302, 4294901760
      %v2066 = vsub.f32 %v1302, %v2065
      %v2067 = vand.u32 %v2066, 4294901760
      %2068 = vmatmul.mubr.f32.gmra.mrb[0].mxu0 %v2067
      %v2069 = vpop.f32.mrb[0].mxu0
      %v2070 = vadd.f32 %v1876, %v2069
      %v2071 = vpop.f32.mrb[0].mxu0
      %2072 = vdwg.mxu0
      %2073 = vmatprep.subr.mxu0 0.0
      %v2074 = vand.u32 %v1306, 4294901760
      %v2075 = vsub.f32 %v1306, %v2074
      %v2076 = vand.u32 %v2075, 4294901760
      %2077 = vmatpush1.msra.mxu0 %v2076
      %2078 = vmatprep.subr.mxu0 0.0
      %2079 = vmatpush1.msra.mxu0 0.0
      %2080 = vmatprep.subr.mxu0 0.0
      %2081 = vmatpush1.msra.mxu0 0.0
      %2082 = vmatprep.subr.mxu0 0.0
      %2083 = vmatpush1.msra.mxu0 0.0
      %2084 = vmatprep.subr.mxu0 0.0
      %2085 = vmatpush1.msra.mxu0 0.0
      %2086 = vmatprep.subr.mxu0 0.0
      %2087 = vmatpush1.msra.mxu0 0.0
      %2088 = vmatprep.subr.mxu0 0.0
      %2089 = vmatpush1.msra.mxu0 0.0
      %2090 = vmatprep.subr.mxu0 0.0
      %2091 = vmatpush1.msra.mxu0 0.0
      %2092 = vmatprep.subr.mxu0 0.0
      %2093 = vmatpush1.msra.mxu0 0.0
      %2094 = vmatprep.subr.mxu0 0.0
      %2095 = vmatpush1.msra.mxu0 0.0
      %2096 = vmatprep.subr.mxu0 0.0
      %2097 = vmatpush1.msra.mxu0 0.0
      %2098 = vmatprep.subr.mxu0 0.0
      %2099 = vmatpush1.msra.mxu0 0.0
      %2100 = vmatprep.subr.mxu0 0.0
      %2101 = vmatpush1.msra.mxu0 0.0
      %2102 = vmatprep.subr.mxu0 0.0
      %2103 = vmatpush1.msra.mxu0 0.0
      %2104 = vmatprep.subr.mxu0 0.0
      %2105 = vmatpush1.msra.mxu0 0.0
      %2106 = vmatprep.subr.mxu0 0.0
      %2107 = vmatpush1.msra.mxu0 0.0
      %2108 = vmatprep.subr.mxu0 0.0
      %2109 = vmatpush1.msra.mxu0 0.0
      %2110 = vmatprep.subr.mxu0 0.0
      %2111 = vmatpush1.msra.mxu0 0.0
      %2112 = vmatprep.subr.mxu0 0.0
      %2113 = vmatpush1.msra.mxu0 0.0
      %2114 = vmatprep.subr.mxu0 0.0
      %2115 = vmatpush1.msra.mxu0 0.0
      %2116 = vmatprep.subr.mxu0 0.0
      %2117 = vmatpush1.msra.mxu0 0.0
      %2118 = vmatprep.subr.mxu0 0.0
      %2119 = vmatpush1.msra.mxu0 0.0
      %2120 = vmatprep.subr.mxu0 0.0
      %2121 = vmatpush1.msra.mxu0 0.0
      %2122 = vmatprep.subr.mxu0 0.0
      %2123 = vmatpush1.msra.mxu0 0.0
      %2124 = vmatprep.subr.mxu0 0.0
      %2125 = vmatpush1.msra.mxu0 0.0
      %2126 = vmatprep.subr.mxu0 0.0
      %2127 = vmatpush1.msra.mxu0 0.0
      %2128 = vmatprep.subr.mxu0 0.0
      %2129 = vmatpush1.msra.mxu0 0.0
      %2130 = vmatprep.subr.mxu0 0.0
      %2131 = vmatpush1.msra.mxu0 0.0
      %2132 = vmatprep.subr.mxu0 0.0
      %2133 = vmatpush1.msra.mxu0 0.0
      %2134 = vmatprep.subr.mxu0 0.0
      %2135 = vmatpush1.msra.mxu0 0.0
      %2136 = vmatprep.subr.mxu0 0.0
      %2137 = vmatpush1.msra.mxu0 0.0
      %2138 = vmatprep.subr.mxu0 0.0
      %2139 = vmatpush1.msra.mxu0 0.0
      %2140 = vmatprep.mubr.f32.mxu0 0.0
      %v2141 = vand.u32 %v1257, 4294901760
      %2142 = vmatmul.mubr.f32.gmra.mrb[0].mxu0 %v2141
      %v2143 = vpop.f32.mrb[0].mxu0
      %v2144 = vadd.f32 %v1950, %v2143
      %v2145 = vpop.f32.mrb[0].mxu0
      %2146 = vmatprep.mubr.f32.mxu0 0.0
      %v2147 = vand.u32 %v1260, 4294901760
      %2148 = vmatmul.mubr.f32.gmra.mrb[0].mxu0 %v2147
      %v2149 = vpop.f32.mrb[0].mxu0
      %v2150 = vadd.f32 %v1958, %v2149
      %v2151 = vpop.f32.mrb[0].mxu0
      %2152 = vmatprep.mubr.f32.mxu0 0.0
      %v2153 = vand.u32 %v1263, 4294901760
      %2154 = vmatmul.mubr.f32.gmra.mrb[0].mxu0 %v2153
      %v2155 = vpop.f32.mrb[0].mxu0
      %v2156 = vadd.f32 %v1966, %v2155
      %v2157 = vpop.f32.mrb[0].mxu0
      %2158 = vmatprep.mubr.f32.mxu0 0.0
      %v2159 = vand.u32 %v1266, 4294901760
      %2160 = vmatmul.mubr.f32.gmra.mrb[0].mxu0 %v2159
      %v2161 = vpop.f32.mrb[0].mxu0
      %v2162 = vadd.f32 %v1974, %v2161
      %v2163 = vpop.f32.mrb[0].mxu0
      %2164 = vmatprep.mubr.f32.mxu0 0.0
      %v2165 = vand.u32 %v1269, 4294901760
      %2166 = vmatmul.mubr.f32.gmra.mrb[0].mxu0 %v2165
      %v2167 = vpop.f32.mrb[0].mxu0
      %v2168 = vadd.f32 %v1982, %v2167
      %v2169 = vpop.f32.mrb[0].mxu0
      %2170 = vmatprep.mubr.f32.mxu0 0.0
      %v2171 = vand.u32 %v1272, 4294901760
      %2172 = vmatmul.mubr.f32.gmra.mrb[0].mxu0 %v2171
      %v2173 = vpop.f32.mrb[0].mxu0
      %v2174 = vadd.f32 %v1990, %v2173
      %v2175 = vpop.f32.mrb[0].mxu0
      %2176 = vmatprep.mubr.f32.mxu0 0.0
      %v2177 = vand.u32 %v1275, 4294901760
      %2178 = vmatmul.mubr.f32.gmra.mrb[0].mxu0 %v2177
      %v2179 = vpop.f32.mrb[0].mxu0
      %v2180 = vadd.f32 %v1998, %v2179
      %v2181 = vpop.f32.mrb[0].mxu0
      %2182 = vmatprep.mubr.f32.mxu0 0.0
      %v2183 = vand.u32 %v1278, 4294901760
      %2184 = vmatmul.mubr.f32.gmra.mrb[0].mxu0 %v2183
      %v2185 = vpop.f32.mrb[0].mxu0
      %v2186 = vadd.f32 %v2006, %v2185
      %v2187 = vpop.f32.mrb[0].mxu0
      %2188 = vmatprep.mubr.f32.mxu0 0.0
      %v2189 = vand.u32 %v1281, 4294901760
      %2190 = vmatmul.mubr.f32.gmra.mrb[0].mxu0 %v2189
      %v2191 = vpop.f32.mrb[0].mxu0
      %v2192 = vadd.f32 %v2014, %v2191
      %v2193 = vpop.f32.mrb[0].mxu0
      %2194 = vmatprep.mubr.f32.mxu0 0.0
      %v2195 = vand.u32 %v1284, 4294901760
      %2196 = vmatmul.mubr.f32.gmra.mrb[0].mxu0 %v2195
      %v2197 = vpop.f32.mrb[0].mxu0
      %v2198 = vadd.f32 %v2022, %v2197
      %v2199 = vpop.f32.mrb[0].mxu0
      %2200 = vmatprep.mubr.f32.mxu0 0.0
      %v2201 = vand.u32 %v1287, 4294901760
      %2202 = vmatmul.mubr.f32.gmra.mrb[0].mxu0 %v2201
      %v2203 = vpop.f32.mrb[0].mxu0
      %v2204 = vadd.f32 %v2030, %v2203
      %v2205 = vpop.f32.mrb[0].mxu0
      %2206 = vmatprep.mubr.f32.mxu0 0.0
      %v2207 = vand.u32 %v1290, 4294901760
      %2208 = vmatmul.mubr.f32.gmra.mrb[0].mxu0 %v2207
      %v2209 = vpop.f32.mrb[0].mxu0
      %v2210 = vadd.f32 %v2038, %v2209
      %v2211 = vpop.f32.mrb[0].mxu0
      %2212 = vmatprep.mubr.f32.mxu0 0.0
      %v2213 = vand.u32 %v1293, 4294901760
      %2214 = vmatmul.mubr.f32.gmra.mrb[0].mxu0 %v2213
      %v2215 = vpop.f32.mrb[0].mxu0
      %v2216 = vadd.f32 %v2046, %v2215
      %v2217 = vpop.f32.mrb[0].mxu0
      %2218 = vmatprep.mubr.f32.mxu0 0.0
      %v2219 = vand.u32 %v1296, 4294901760
      %2220 = vmatmul.mubr.f32.gmra.mrb[0].mxu0 %v2219
      %v2221 = vpop.f32.mrb[0].mxu0
      %v2222 = vadd.f32 %v2054, %v2221
      %v2223 = vpop.f32.mrb[0].mxu0
      %2224 = vmatprep.mubr.f32.mxu0 0.0
      %v2225 = vand.u32 %v1299, 4294901760
      %2226 = vmatmul.mubr.f32.gmra.mrb[0].mxu0 %v2225
      %v2227 = vpop.f32.mrb[0].mxu0
      %v2228 = vadd.f32 %v2062, %v2227
      %v2229 = vpop.f32.mrb[0].mxu0
      %2230 = vmatprep.mubr.f32.mxu0 0.0
      %v2231 = vand.u32 %v1302, 4294901760
      %2232 = vmatmul.mubr.f32.gmra.mrb[0].mxu0 %v2231
      %v2233 = vpop.f32.mrb[0].mxu0
      %v2234 = vadd.f32 %v2070, %v2233
      %v2235 = vpop.f32.mrb[0].mxu0
      %2236 = vdwg.mxu0
      %2237 = vmatprep.subr.mxu0 0.0
      %v2238 = vand.u32 %v1306, 4294901760
      %2239 = vmatpush1.msra.mxu0 %v2238
      %2240 = vmatprep.subr.mxu0 0.0
      %2241 = vmatpush1.msra.mxu0 0.0
      %2242 = vmatprep.subr.mxu0 0.0
      %2243 = vmatpush1.msra.mxu0 0.0
      %2244 = vmatprep.subr.mxu0 0.0
      %2245 = vmatpush1.msra.mxu0 0.0
      %2246 = vmatprep.subr.mxu0 0.0
      %2247 = vmatpush1.msra.mxu0 0.0
      %2248 = vmatprep.subr.mxu0 0.0
      %2249 = vmatpush1.msra.mxu0 0.0
      %2250 = vmatprep.subr.mxu0 0.0
      %2251 = vmatpush1.msra.mxu0 0.0
      %2252 = vmatprep.subr.mxu0 0.0
      %2253 = vmatpush1.msra.mxu0 0.0
      %2254 = vmatprep.subr.mxu0 0.0
      %2255 = vmatpush1.msra.mxu0 0.0
      %2256 = vmatprep.subr.mxu0 0.0
      %2257 = vmatpush1.msra.mxu0 0.0
      %2258 = vmatprep.subr.mxu0 0.0
      %2259 = vmatpush1.msra.mxu0 0.0
      %2260 = vmatprep.subr.mxu0 0.0
      %2261 = vmatpush1.msra.mxu0 0.0
      %2262 = vmatprep.subr.mxu0 0.0
      %2263 = vmatpush1.msra.mxu0 0.0
      %2264 = vmatprep.subr.mxu0 0.0
      %2265 = vmatpush1.msra.mxu0 0.0
      %2266 = vmatprep.subr.mxu0 0.0
      %2267 = vmatpush1.msra.mxu0 0.0
      %2268 = vmatprep.subr.mxu0 0.0
      %2269 = vmatpush1.msra.mxu0 0.0
      %2270 = vmatprep.subr.mxu0 0.0
      %2271 = vmatpush1.msra.mxu0 0.0
      %2272 = vmatprep.subr.mxu0 0.0
      %2273 = vmatpush1.msra.mxu0 0.0
      %2274 = vmatprep.subr.mxu0 0.0
      %2275 = vmatpush1.msra.mxu0 0.0
      %2276 = vmatprep.subr.mxu0 0.0
      %2277 = vmatpush1.msra.mxu0 0.0
      %2278 = vmatprep.subr.mxu0 0.0
      %2279 = vmatpush1.msra.mxu0 0.0
      %2280 = vmatprep.subr.mxu0 0.0
      %2281 = vmatpush1.msra.mxu0 0.0
      %2282 = vmatprep.subr.mxu0 0.0
      %2283 = vmatpush1.msra.mxu0 0.0
      %2284 = vmatprep.subr.mxu0 0.0
      %2285 = vmatpush1.msra.mxu0 0.0
      %2286 = vmatprep.subr.mxu0 0.0
      %2287 = vmatpush1.msra.mxu0 0.0
      %2288 = vmatprep.subr.mxu0 0.0
      %2289 = vmatpush1.msra.mxu0 0.0
      %2290 = vmatprep.subr.mxu0 0.0
      %2291 = vmatpush1.msra.mxu0 0.0
      %2292 = vmatprep.subr.mxu0 0.0
      %2293 = vmatpush1.msra.mxu0 0.0
      %2294 = vmatprep.subr.mxu0 0.0
      %2295 = vmatpush1.msra.mxu0 0.0
      %2296 = vmatprep.subr.mxu0 0.0
      %2297 = vmatpush1.msra.mxu0 0.0
      %2298 = vmatprep.subr.mxu0 0.0
      %2299 = vmatpush1.msra.mxu0 0.0
      %2300 = vmatprep.subr.mxu0 0.0
      %2301 = vmatpush1.msra.mxu0 0.0
      %2302 = vmatprep.mubr.f32.mxu0 0.0
      %v2303 = vand.u32 %v1257, 4294901760
      %2304 = vmatmul.mubr.f32.gmra.mrb[0].mxu0 %v2303
      %v2305 = vpop.f32.mrb[0].mxu0
      %v2306 = vadd.f32 %v2144, %v2305
      %v2307 = vpop.f32.mrb[0].mxu0
      %2308 = vmatprep.mubr.f32.mxu0 0.0
      %v2309 = vand.u32 %v1260, 4294901760
      %2310 = vmatmul.mubr.f32.gmra.mrb[0].mxu0 %v2309
      %v2311 = vpop.f32.mrb[0].mxu0
      %v2312 = vadd.f32 %v2150, %v2311
      %v2313 = vpop.f32.mrb[0].mxu0
      %2314 = vmatprep.mubr.f32.mxu0 0.0
      %v2315 = vand.u32 %v1263, 4294901760
      %2316 = vmatmul.mubr.f32.gmra.mrb[0].mxu0 %v2315
      %v2317 = vpop.f32.mrb[0].mxu0
      %v2318 = vadd.f32 %v2156, %v2317
      %v2319 = vpop.f32.mrb[0].mxu0
      %2320 = vmatprep.mubr.f32.mxu0 0.0
      %v2321 = vand.u32 %v1266, 4294901760
      %2322 = vmatmul.mubr.f32.gmra.mrb[0].mxu0 %v2321
      %v2323 = vpop.f32.mrb[0].mxu0
      %v2324 = vadd.f32 %v2162, %v2323
      %v2325 = vpop.f32.mrb[0].mxu0
      %2326 = vmatprep.mubr.f32.mxu0 0.0
      %v2327 = vand.u32 %v1269, 4294901760
      %2328 = vmatmul.mubr.f32.gmra.mrb[0].mxu0 %v2327
      %v2329 = vpop.f32.mrb[0].mxu0
      %v2330 = vadd.f32 %v2168, %v2329
      %v2331 = vpop.f32.mrb[0].mxu0
      %2332 = vmatprep.mubr.f32.mxu0 0.0
      %v2333 = vand.u32 %v1272, 4294901760
      %2334 = vmatmul.mubr.f32.gmra.mrb[0].mxu0 %v2333
      %v2335 = vpop.f32.mrb[0].mxu0
      %v2336 = vadd.f32 %v2174, %v2335
      %v2337 = vpop.f32.mrb[0].mxu0
      %2338 = vmatprep.mubr.f32.mxu0 0.0
      %v2339 = vand.u32 %v1275, 4294901760
      %2340 = vmatmul.mubr.f32.gmra.mrb[0].mxu0 %v2339
      %v2341 = vpop.f32.mrb[0].mxu0
      %v2342 = vadd.f32 %v2180, %v2341
      %v2343 = vpop.f32.mrb[0].mxu0
      %2344 = vmatprep.mubr.f32.mxu0 0.0
      %v2345 = vand.u32 %v1278, 4294901760
      %2346 = vmatmul.mubr.f32.gmra.mrb[0].mxu0 %v2345
      %v2347 = vpop.f32.mrb[0].mxu0
      %v2348 = vadd.f32 %v2186, %v2347
      %v2349 = vpop.f32.mrb[0].mxu0
      %2350 = vmatprep.mubr.f32.mxu0 0.0
      %v2351 = vand.u32 %v1281, 4294901760
      %2352 = vmatmul.mubr.f32.gmra.mrb[0].mxu0 %v2351
      %v2353 = vpop.f32.mrb[0].mxu0
      %v2354 = vadd.f32 %v2192, %v2353
      %v2355 = vpop.f32.mrb[0].mxu0
      %2356 = vmatprep.mubr.f32.mxu0 0.0
      %v2357 = vand.u32 %v1284, 4294901760
      %2358 = vmatmul.mubr.f32.gmra.mrb[0].mxu0 %v2357
      %v2359 = vpop.f32.mrb[0].mxu0
      %v2360 = vadd.f32 %v2198, %v2359
      %v2361 = vpop.f32.mrb[0].mxu0
      %2362 = vmatprep.mubr.f32.mxu0 0.0
      %v2363 = vand.u32 %v1287, 4294901760
      %2364 = vmatmul.mubr.f32.gmra.mrb[0].mxu0 %v2363
      %v2365 = vpop.f32.mrb[0].mxu0
      %v2366 = vadd.f32 %v2204, %v2365
      %v2367 = vpop.f32.mrb[0].mxu0
      %2368 = vmatprep.mubr.f32.mxu0 0.0
      %v2369 = vand.u32 %v1290, 4294901760
      %2370 = vmatmul.mubr.f32.gmra.mrb[0].mxu0 %v2369
      %v2371 = vpop.f32.mrb[0].mxu0
      %v2372 = vadd.f32 %v2210, %v2371
      %v2373 = vpop.f32.mrb[0].mxu0
      %2374 = vmatprep.mubr.f32.mxu0 0.0
      %v2375 = vand.u32 %v1293, 4294901760
      %2376 = vmatmul.mubr.f32.gmra.mrb[0].mxu0 %v2375
      %v2377 = vpop.f32.mrb[0].mxu0
      %v2378 = vadd.f32 %v2216, %v2377
      %v2379 = vpop.f32.mrb[0].mxu0
      %2380 = vmatprep.mubr.f32.mxu0 0.0
      %v2381 = vand.u32 %v1296, 4294901760
      %2382 = vmatmul.mubr.f32.gmra.mrb[0].mxu0 %v2381
      %v2383 = vpop.f32.mrb[0].mxu0
      %v2384 = vadd.f32 %v2222, %v2383
      %v2385 = vpop.f32.mrb[0].mxu0
      %2386 = vmatprep.mubr.f32.mxu0 0.0
      %v2387 = vand.u32 %v1299, 4294901760
      %2388 = vmatmul.mubr.f32.gmra.mrb[0].mxu0 %v2387
      %v2389 = vpop.f32.mrb[0].mxu0
      %v2390 = vadd.f32 %v2228, %v2389
      %v2391 = vpop.f32.mrb[0].mxu0
      %2392 = vmatprep.mubr.f32.mxu0 0.0
      %v2393 = vand.u32 %v1302, 4294901760
      %2394 = vmatmul.mubr.f32.gmra.mrb[0].mxu0 %v2393
      %v2395 = vpop.f32.mrb[0].mxu0
      %v2396 = vadd.f32 %v2234, %v2395
      %v2397 = vpop.f32.mrb[0].mxu0
      %2398 = vdwg.mxu0
      %2399 = vst.msk [vmem:[%s345] sm:$0xff] %vm1255, %v2306
      %2400 = vst.msk [vmem:[%s345 + $0x8] sm:$0xff] %vm1255, %v2312
      %2401 = vst.msk [vmem:[%s345 + $0x10] sm:$0xff] %vm1255, %v2318
      %2402 = vst.msk [vmem:[%s345 + $0x18] sm:$0xff] %vm1255, %v2324
      %2403 = vst.msk [vmem:[%s345 + $0x20] sm:$0xff] %vm1255, %v2330
      %2404 = vst.msk [vmem:[%s345 + $0x28] sm:$0xff] %vm1255, %v2336
      %2405 = vst.msk [vmem:[%s345 + $0x30] sm:$0xff] %vm1255, %v2342
      %2406 = vst.msk [vmem:[%s345 + $0x38] sm:$0xff] %vm1255, %v2348
      %2407 = vst.msk [vmem:[%s345 + $0x40] sm:$0xff] %vm1255, %v2354
      %2408 = vst.msk [vmem:[%s345 + $0x48] sm:$0xff] %vm1255, %v2360
      %2409 = vst.msk [vmem:[%s345 + $0x50] sm:$0xff] %vm1255, %v2366
      %2410 = vst.msk [vmem:[%s345 + $0x58] sm:$0xff] %vm1255, %v2372
      %2411 = vst.msk [vmem:[%s345 + $0x60] sm:$0xff] %vm1255, %v2378
      %2412 = vst.msk [vmem:[%s345 + $0x68] sm:$0xff] %vm1255, %v2384
      %2413 = vst.msk [vmem:[%s345 + $0x70] sm:$0xff] %vm1255, %v2390
      %2414 = vst.msk [vmem:[%s345 + $0x78] sm:$0xff] %vm1255, %v2396
      %s2415 = smul.u32 8, %s21
      %p2416 = scmp.lt.s32.totalorder %s20, 1
      %s2417 = scalar_select %p2416, %s20, 1
      %p2418 = scmp.lt.s32.totalorder %s2415, 15
      %s2419 = scalar_select %p2418, %s2415, 15
      %s2420 = smul.addr %s2419, 2
      %s2421 = smul.addr %s2417, 32
      %s2422 = sadd.s32 %s2420, %s2421
      %s2423 = smul.addr %s2422, 8
      %s2424 = scalar_lea.vmem %s5, %s2423
      // Predicated region
      $region41: #{tpu_custom_call.1} parent=39 // pred_check
        %p2425 = pneg %p171
      $region42: #{tpu_custom_call.1} parent=39 // pred_check_branch
        %2427 = sbr.rel (%p2425) target = $region44
      $region43: #{tpu_custom_call.1} parent=39 // pred_region
        %s2428 = smul.u32 8, %s21
      $region44: #{tpu_custom_call.1} parent=39 // pred_fallthru
        _
    $region40: #{tpu_custom_call.1} parent=5 // pred_fallthru
      _
    %p2429 = scmp.le.s32.totalorder 2, %s11
    // Predicated region
    $region45: #{tpu_custom_call.1} parent=5 // pred_check
      %p2430 = pneg %p2429
    $region46: #{tpu_custom_call.1} parent=5 // pred_check_branch
      %2432 = sbr.rel (%p2430) target = $region48
    $region47: #{tpu_custom_call.1} parent=5 // pred_region
      %s2433 = ssub.s32 %s11, 2
      // Predicated region
      $region49: #{tpu_custom_call.1} parent=47 // pred_check
        %p2434 = pneg %p177
      $region50: #{tpu_custom_call.1} parent=47 // pred_check_branch
        %2436 = sbr.rel (%p2434) target = $region52
      $region51: #{tpu_custom_call.1} parent=47 // pred_region
        %s2437 = smul.u32 8, %s23
        %p2438 = scmp.lt.s32.totalorder %s22, 1
        %s2439 = scalar_select %p2438, %s22, 1
        %p2440 = scmp.lt.s32.totalorder %s2437, 15
        %s2441 = scalar_select %p2440, %s2437, 15
        %s2442 = smul.addr %s2441, 2
        %s2443 = smul.addr %s2439, 32
        %s2444 = sadd.s32 %s2442, %s2443
        %s2445 = smul.addr %s2444, 8
        %s2446 = scalar_lea.vmem %s5, %s2445
      $region52: #{tpu_custom_call.1} parent=47 // pred_fallthru
        _
    $region48: #{tpu_custom_call.1} parent=5 // pred_fallthru
      _
  $region6: #{tpu_custom_call.1} parent=0 // loop_footer
    %s15 = sadd.s32 1, %s11
  $region7: #{tpu_custom_call.1} parent=0 // loop_footer_branch
    %10 = sbr.rel target = $region3
  $region8: #{tpu_custom_call.1} parent=0 // loop_exit
    _

</llo_original>
